<compile_context>
chip_gen: v5e
topology: v5e:2x2
jax: 0.10.0
libtpu: 0.0.40
codegen_flags: <defaults>
</compile_context>

<pallas_src>
import jax
import jax.numpy as jnp
from jax.experimental import pallas as pl
from jax.experimental.pallas import tpu as pltpu

EPS = 1e-5


# ----------------------------- kernels --------------------------------------

def _conv_tile(x_ref, w_ref):
    """Transposed-conv compute for one row tile.

    x_ref: (TH+2, W+2, Cin) bf16   padded input row tile (1-row/col halo).
    w_ref: (9*Cin, 4*Cout)  bf16   fused sub-filter matrix
                                   (rows pack (u,v,ic), cols pack (a,b,oc)).
    returns (TH*W, 4*Cout) f32.
    """
    th = x_ref.shape[0] - 2
    w = x_ref.shape[1] - 2
    cin = x_ref.shape[2]
    xt = x_ref[...]                                     # one VMEM load
    slabs = []
    for u in range(3):
        for v in range(3):
            slabs.append(xt[u:u + th, v:v + w, :])      # (TH, W, Cin)
    patch = jnp.concatenate(slabs, axis=-1)             # (TH, W, 9*Cin)
    patch = patch.reshape(th * w, 9 * cin)
    # Single fused MXU matmul, f32 accumulation.
    return jnp.dot(patch, w_ref[...], preferred_element_type=jnp.float32)


def _stats_kernel(x_ref, w_ref, stats_ref):
    """Pass 1: per-tile per-channel sum and sum-of-squares of the conv output."""
    y = _conv_tile(x_ref, w_ref)                        # (TH*W, 4*Cout) f32
    s = jnp.sum(y, axis=0, keepdims=True)
    ss = jnp.sum(y * y, axis=0, keepdims=True)
    stats_ref[...] = jnp.concatenate([s, ss], axis=0)   # (2, 4*Cout)


def _apply_kernel(x_ref, w_ref, bn_ref, out_ref):
    """Pass 2: recompute conv tile, apply BN (precomputed scale/shift) + ReLU.

    bn_ref: (2, 4*Cout) f32 — row 0 = scale, row 1 = shift.
    out_ref: (TH*W, 4*Cout) f32 — natural matmul layout, no in-kernel relayout.
    """
    y = _conv_tile(x_ref, w_ref)                        # (TH*W, 4*Cout) f32
    y = y * bn_ref[0:1, :] + bn_ref[1:2, :]
    out_ref[...] = jnp.maximum(y, 0.0)


# ----------------------------- wrapper ---------------------------------------

def _pick_tile_h(h, w, cin, cout, vmem_budget=8 * 1024 * 1024):
    """Largest divisor of H whose per-tile working set fits the VMEM budget."""
    c4 = 4 * cout

    def tile_bytes(th):
        x_b = (th + 2) * (w + 2) * cin * 2          # bf16 input tile
        patch_b = th * w * 9 * cin * 2              # in-kernel patch intermediate
        y_b = th * w * c4 * 4                       # f32 matmul output / out tile
        return 2 * x_b + 2 * y_b + patch_b          # double-buffered in/out

    th = h
    while th > 1 and (h % th != 0 or tile_bytes(th) > vmem_budget):
        th -= 1
    return th


def _fused_weight(w_ct):
    """(Cin, Cout, 4, 4) ConvTranspose2d weight -> (9*Cin, 4*Cout) fused matrix.

    out[n, oc, 2m+a, 2q+b] = sum_{u,v,ic} x_pad[n, m+u, q+v, ic] * Wf[(u*3+v)*Cin+ic,
                                                                      (a*2+b)*Cout+oc]
    with Wf nonzero only for a <= u <= a+1 and b <= v <= b+1, value
    w_ct[ic, oc, 3+a-2u, 3+b-2v].
    """
    cin, cout = w_ct.shape[0], w_ct.shape[1]
    zeros = jnp.zeros((cin, cout), w_ct.dtype)
    rows = []
    for u in range(3):
        for v in range(3):
            cols = []
            for a in range(2):
                for b in range(2):
                    if a <= u <= a + 1 and b <= v <= b + 1:
                        cols.append(w_ct[:, :, 3 + a - 2 * u, 3 + b - 2 * v])
                    else:
                        cols.append(zeros)
            rows.append(jnp.concatenate(cols, axis=1))   # (Cin, 4*Cout)
    return jnp.concatenate(rows, axis=0)                 # (9*Cin, 4*Cout)


def upsampling_forward(x, w_ct, gamma, beta):
    """x: (N, Cin, H, W) NCHW f32; w_ct: (Cin, Cout, 4, 4); gamma/beta: (Cout,).
    Returns (N, Cout, 2H, 2W) f32."""
    n, cin, h, w = x.shape
    cout = w_ct.shape[1]
    th = _pick_tile_h(h, w, cin, cout)
    n_ht = h // th
    c4 = 4 * cout
    k = 9 * cin

    # ---- glue: pad once, build halo'd row tiles (bf16), fused weight (bf16) ----
    x_nhwc = jnp.transpose(x, (0, 2, 3, 1))                       # (N, H, W, Cin)
    x_p = jnp.pad(x_nhwc, ((0, 0), (1, 1), (1, 1), (0, 0)))       # (N, H+2, W+2, Cin)
    x_tiles = jnp.stack(
        [x_p[:, t * th: t * th + th + 2] for t in range(n_ht)], axis=1
    ).astype(jnp.bfloat16)                                        # (N, n_ht, TH+2, W+2, Cin)
    wf = _fused_weight(w_ct).astype(jnp.bfloat16)                 # (9*Cin, 4*Cout)

    x_spec = pl.BlockSpec((None, None, th + 2, w + 2, cin),
                          lambda i, t: (i, t, 0, 0, 0))
    w_spec = pl.BlockSpec((k, c4), lambda i, t: (0, 0))
    cparams = pltpu.CompilerParams(
        dimension_semantics=("parallel", "parallel"),
        vmem_limit_bytes=32 * 1024 * 1024)

    flops = 2 * n * h * w * k * c4
    in_bytes = x_tiles.size * 2 + wf.size * 2

    # ---- pass 1: per-tile channel sums / sums-of-squares (y never hits HBM) ----
    stats = pl.pallas_call(
        _stats_kernel,
        out_shape=jax.ShapeDtypeStruct((n, n_ht, 2, c4), jnp.float32),
        grid=(n, n_ht),
        in_specs=[x_spec, w_spec],
        out_specs=pl.BlockSpec((None, None, 2, c4), lambda i, t: (i, t, 0, 0)),
        compiler_params=cparams,
        cost_estimate=pl.CostEstimate(
            flops=flops, transcendentals=0,
            bytes_accessed=in_bytes + n * n_ht * 2 * c4 * 4),
    )(x_tiles, wf)

    # ---- tiny O(Cout) reduction + BN scale/shift in plain JAX ----
    s = stats.reshape(n * n_ht, 2, 2, 2, cout)           # (tiles, {sum,sq}, a, b, oc)
    count = n * (2 * h) * (2 * w)
    mean = s[:, 0].sum(axis=(0, 1, 2)) / count
    var = s[:, 1].sum(axis=(0, 1, 2)) / count - mean * mean   # biased (training BN)
    scale = gamma * jax.lax.rsqrt(var + EPS)
    shift = beta - mean * scale
    bn = jnp.stack([jnp.tile(scale, 4), jnp.tile(shift, 4)]).astype(jnp.float32)  # (2, 4*Cout)

    # ---- pass 2: recompute conv tile, fused BN + ReLU, parity-packed output ----
    out4 = pl.pallas_call(
        _apply_kernel,
        out_shape=jax.ShapeDtypeStruct((n, n_ht, th * w, c4), jnp.float32),
        grid=(n, n_ht),
        in_specs=[x_spec, w_spec,
                  pl.BlockSpec((2, c4), lambda i, t: (0, 0))],
        out_specs=pl.BlockSpec((None, None, th * w, c4),
                               lambda i, t: (i, t, 0, 0)),
        compiler_params=cparams,
        cost_estimate=pl.CostEstimate(
            flops=flops, transcendentals=0,
            bytes_accessed=in_bytes + 2 * c4 * 4 + n * h * w * c4 * 4),
    )(x_tiles, wf, bn)

    # ---- glue: interleave parities + convert to NCHW (module returns NCHW) ----
    # TODO(synk): if the downstream consumer accepts NHWC, return
    #             (n, h, a, w, b, oc) -> (N, 2H, 2W, Cout) and drop this transpose.
    o = out4.reshape(n, h, w, 2, 2, cout)                # (n, m, q, a, b, oc)
    o = jnp.transpose(o, (0, 5, 1, 3, 2, 4))             # (n, oc, m, a, q, b)
    return o.reshape(n, cout, 2 * h, 2 * w)


# ----------------------------- reference & test -------------------------------

def _reference(x, w_ct, gamma, beta):
    """Pure-JAX reference: ConvTranspose2d -> training-mode BN -> ReLU.
    Inputs are bf16-rounded to match the kernel's bf16 matmul operands."""
    xq = x.astype(jnp.bfloat16).astype(jnp.float32)
    wq = w_ct.astype(jnp.bfloat16).astype(jnp.float32)
    w_conv = jnp.transpose(wq[:, :, ::-1, ::-1], (1, 0, 2, 3))   # (Cout, Cin, 4, 4)
    y = jax.lax.conv_general_dilated(
        xq, w_conv, window_strides=(1, 1), padding=((2, 2), (2, 2)),
        lhs_dilation=(2, 2), dimension_numbers=("NCHW", "OIHW", "NCHW"),
        precision=jax.lax.Precision.HIGHEST)
    mean = y.mean(axis=(0, 2, 3), keepdims=True)
    var = ((y - mean) ** 2).mean(axis=(0, 2, 3), keepdims=True)
    y = (y - mean) * jax.lax.rsqrt(var + EPS)
    y = y * gamma.reshape(1, -1, 1, 1) + beta.reshape(1, -1, 1, 1)
    return jnp.maximum(y, 0.0)


if __name__ == "__main__":
    N, IN_DIM, OUT_DIM, H, W = 2, 4, 8, 16, 16

    key = jax.random.PRNGKey(0)
    kx, kw, kg = jax.random.split(key, 3)

    x = jax.random.normal(kx, (N, IN_DIM, H, W), dtype=jnp.float32)
    # weights_init: ConvTranspose weight ~ N(0, 0.02); BN gamma ~ N(1, 0.02), beta = 0.
    w_ct = 0.02 * jax.random.normal(kw, (IN_DIM, OUT_DIM, 4, 4), dtype=jnp.float32)
    gamma = 1.0 + 0.02 * jax.random.normal(kg, (OUT_DIM,), dtype=jnp.float32)
    beta = jnp.zeros((OUT_DIM,), dtype=jnp.float32)

    fwd = jax.jit(upsampling_forward)
    y = jax.block_until_ready(fwd(x, w_ct, gamma, beta))

    assert y.shape == (N, OUT_DIM, 2 * H, 2 * W), y.shape

    y_ref = _reference(x, w_ct, gamma, beta)
    err = float(jnp.max(jnp.abs(y - y_ref)))
    assert jnp.allclose(y, y_ref, rtol=2e-3, atol=2e-3), err

    print("KERNEL_OK")
</pallas_src>

<mosaic_0001>
module attributes {stable_mosaic.version = 11 : i64} {
  func.func @_stats_kernel(%arg0: i32, %arg1: i32, %arg2: memref<1x1x18x18x4xbf16, #tpu.memory_space<vmem>>, %arg3: memref<36x32xbf16, #tpu.memory_space<vmem>>, %arg4: memref<1x1x2x32xf32, #tpu.memory_space<vmem>>) attributes {dimension_semantics = [#tpu.dimension_semantics<parallel>, #tpu.dimension_semantics<parallel>], iteration_bounds = array<i64: 2, 1>, scalar_prefetch = 0 : i64, scratch_operands = 0 : i64, tpu.core_type = #tpu.core_type<tc>, window_params = [{transform_indices = @transform_0, window_bounds = array<i64: 1, 1, 18, 18, 4>}, {pipeline_mode = #tpu.pipeline_mode<synchronous>, transform_indices = @transform_1, window_bounds = array<i64: 36, 32>}, {transform_indices = @transform_2, window_bounds = array<i64: 1, 1, 2, 32>}]} {
    %c0 = arith.constant 0 : index
    %c0_0 = arith.constant 0 : index
    %c0_1 = arith.constant 0 : index
    %c0_2 = arith.constant 0 : index
    %c0_3 = arith.constant 0 : index
    %0 = vector.load %arg2[%c0, %c0_0, %c0_1, %c0_2, %c0_3] : memref<1x1x18x18x4xbf16, #tpu.memory_space<vmem>>, vector<1x1x18x18x4xbf16>
    %1 = vector.shape_cast %0 : vector<1x1x18x18x4xbf16> to vector<18x18x4xbf16>
    %2 = vector.extract_strided_slice %1 {offsets = [0, 0, 0], sizes = [16, 16, 4], strides = [1, 1, 1]} : vector<18x18x4xbf16> to vector<16x16x4xbf16>
    %3 = vector.extract_strided_slice %1 {offsets = [0, 1, 0], sizes = [16, 16, 4], strides = [1, 1, 1]} : vector<18x18x4xbf16> to vector<16x16x4xbf16>
    %4 = vector.extract_strided_slice %1 {offsets = [0, 2, 0], sizes = [16, 16, 4], strides = [1, 1, 1]} : vector<18x18x4xbf16> to vector<16x16x4xbf16>
    %5 = vector.extract_strided_slice %1 {offsets = [1, 0, 0], sizes = [16, 16, 4], strides = [1, 1, 1]} : vector<18x18x4xbf16> to vector<16x16x4xbf16>
    %6 = vector.extract_strided_slice %1 {offsets = [1, 1, 0], sizes = [16, 16, 4], strides = [1, 1, 1]} : vector<18x18x4xbf16> to vector<16x16x4xbf16>
    %7 = vector.extract_strided_slice %1 {offsets = [1, 2, 0], sizes = [16, 16, 4], strides = [1, 1, 1]} : vector<18x18x4xbf16> to vector<16x16x4xbf16>
    %8 = vector.extract_strided_slice %1 {offsets = [2, 0, 0], sizes = [16, 16, 4], strides = [1, 1, 1]} : vector<18x18x4xbf16> to vector<16x16x4xbf16>
    %9 = vector.extract_strided_slice %1 {offsets = [2, 1, 0], sizes = [16, 16, 4], strides = [1, 1, 1]} : vector<18x18x4xbf16> to vector<16x16x4xbf16>
    %10 = vector.extract_strided_slice %1 {offsets = [2, 2, 0], sizes = [16, 16, 4], strides = [1, 1, 1]} : vector<18x18x4xbf16> to vector<16x16x4xbf16>
    %11 = tpu.concatenate %2, %3, %4, %5, %6, %7, %8, %9, %10 in 2 : vector<16x16x4xbf16>, vector<16x16x4xbf16>, vector<16x16x4xbf16>, vector<16x16x4xbf16>, vector<16x16x4xbf16>, vector<16x16x4xbf16>, vector<16x16x4xbf16>, vector<16x16x4xbf16>, vector<16x16x4xbf16> -> vector<16x16x36xbf16>
    %12 = vector.shape_cast %11 : vector<16x16x36xbf16> to vector<256x36xbf16>
    %c0_4 = arith.constant 0 : index
    %c0_5 = arith.constant 0 : index
    %13 = vector.load %arg3[%c0_4, %c0_5] : memref<36x32xbf16, #tpu.memory_space<vmem>>, vector<36x32xbf16>
    %cst = arith.constant dense<0.000000e+00> : vector<256x32xf32>
    %14 = tpu.matmul %12, %13, %cst {dimension_numbers = #tpu.dot_dimension_numbers<[1], [0], [0], [1], [0, 0, 1, 1], [], []>} : vector<256x36xbf16>, vector<36x32xbf16>, vector<256x32xf32> -> vector<256x32xf32>
    %cst_6 = arith.constant dense<0.000000e+00> : vector<32xf32>
    %15 = vector.multi_reduction <add>, %14, %cst_6 [0] : vector<256x32xf32> to vector<32xf32>
    %16 = vector.shape_cast %15 : vector<32xf32> to vector<1x32xf32>
    %17 = arith.mulf %14, %14 : vector<256x32xf32>
    %cst_7 = arith.constant dense<0.000000e+00> : vector<32xf32>
    %18 = vector.multi_reduction <add>, %17, %cst_7 [0] : vector<256x32xf32> to vector<32xf32>
    %19 = vector.shape_cast %18 : vector<32xf32> to vector<1x32xf32>
    %20 = tpu.concatenate %16, %19 in 0 : vector<1x32xf32>, vector<1x32xf32> -> vector<2x32xf32>
    %c0_8 = arith.constant 0 : index
    %c0_9 = arith.constant 0 : index
    %c0_10 = arith.constant 0 : index
    %c0_11 = arith.constant 0 : index
    %21 = vector.load %arg4[%c0_8, %c0_9, %c0_10, %c0_11] : memref<1x1x2x32xf32, #tpu.memory_space<vmem>>, vector<1x1x2x32xf32>
    %22 = vector.shape_cast %21 : vector<1x1x2x32xf32> to vector<2x32xf32>
    %23 = vector.shape_cast %20 : vector<2x32xf32> to vector<1x1x2x32xf32>
    tpu.vector_store %arg4[%c0_8, %c0_9, %c0_10, %c0_11], %23 {strides = array<i32>} : memref<1x1x2x32xf32, #tpu.memory_space<vmem>>, vector<1x1x2x32xf32>,
    return
  }
  func.func @transform_0(%arg0: i32, %arg1: i32) -> (i32, i32, i32, i32, i32) {
    %c0_i32 = arith.constant 0 : i32
    %c0_i32_0 = arith.constant 0 : i32
    %c0_i32_1 = arith.constant 0 : i32
    %c0_i32_2 = arith.constant 0 : i32
    return %arg0, %arg1, %c0_i32, %c0_i32_0, %c0_i32_1 : i32, i32, i32, i32, i32
  }
  func.func @transform_1(%arg0: i32, %arg1: i32) -> (i32, i32) {
    %c0_i32 = arith.constant 0 : i32
    %c0_i32_0 = arith.constant 0 : i32
    %c0_i32_1 = arith.constant 0 : i32
    return %c0_i32, %c0_i32_0 : i32, i32
  }
  func.func @transform_2(%arg0: i32, %arg1: i32) -> (i32, i32, i32, i32) {
    %c0_i32 = arith.constant 0 : i32
    %c0_i32_0 = arith.constant 0 : i32
    %c0_i32_1 = arith.constant 0 : i32
    return %arg0, %arg1, %c0_i32, %c0_i32_0 : i32, i32, i32, i32
  }
}

module attributes {stable_mosaic.version = 11 : i64} {
  func.func @_apply_kernel(%arg0: i32, %arg1: i32, %arg2: memref<1x1x18x18x4xbf16, #tpu.memory_space<vmem>>, %arg3: memref<36x32xbf16, #tpu.memory_space<vmem>>, %arg4: memref<2x32xf32, #tpu.memory_space<vmem>>, %arg5: memref<1x1x256x32xf32, #tpu.memory_space<vmem>>) attributes {dimension_semantics = [#tpu.dimension_semantics<parallel>, #tpu.dimension_semantics<parallel>], iteration_bounds = array<i64: 2, 1>, scalar_prefetch = 0 : i64, scratch_operands = 0 : i64, tpu.core_type = #tpu.core_type<tc>, window_params = [{transform_indices = @transform_0, window_bounds = array<i64: 1, 1, 18, 18, 4>}, {pipeline_mode = #tpu.pipeline_mode<synchronous>, transform_indices = @transform_1, window_bounds = array<i64: 36, 32>}, {pipeline_mode = #tpu.pipeline_mode<synchronous>, transform_indices = @transform_2, window_bounds = array<i64: 2, 32>}, {transform_indices = @transform_3, window_bounds = array<i64: 1, 1, 256, 32>}]} {
    %c0 = arith.constant 0 : index
    %c0_0 = arith.constant 0 : index
    %c0_1 = arith.constant 0 : index
    %c0_2 = arith.constant 0 : index
    %c0_3 = arith.constant 0 : index
    %0 = vector.load %arg2[%c0, %c0_0, %c0_1, %c0_2, %c0_3] : memref<1x1x18x18x4xbf16, #tpu.memory_space<vmem>>, vector<1x1x18x18x4xbf16>
    %1 = vector.shape_cast %0 : vector<1x1x18x18x4xbf16> to vector<18x18x4xbf16>
    %2 = vector.extract_strided_slice %1 {offsets = [0, 0, 0], sizes = [16, 16, 4], strides = [1, 1, 1]} : vector<18x18x4xbf16> to vector<16x16x4xbf16>
    %3 = vector.extract_strided_slice %1 {offsets = [0, 1, 0], sizes = [16, 16, 4], strides = [1, 1, 1]} : vector<18x18x4xbf16> to vector<16x16x4xbf16>
    %4 = vector.extract_strided_slice %1 {offsets = [0, 2, 0], sizes = [16, 16, 4], strides = [1, 1, 1]} : vector<18x18x4xbf16> to vector<16x16x4xbf16>
    %5 = vector.extract_strided_slice %1 {offsets = [1, 0, 0], sizes = [16, 16, 4], strides = [1, 1, 1]} : vector<18x18x4xbf16> to vector<16x16x4xbf16>
    %6 = vector.extract_strided_slice %1 {offsets = [1, 1, 0], sizes = [16, 16, 4], strides = [1, 1, 1]} : vector<18x18x4xbf16> to vector<16x16x4xbf16>
    %7 = vector.extract_strided_slice %1 {offsets = [1, 2, 0], sizes = [16, 16, 4], strides = [1, 1, 1]} : vector<18x18x4xbf16> to vector<16x16x4xbf16>
    %8 = vector.extract_strided_slice %1 {offsets = [2, 0, 0], sizes = [16, 16, 4], strides = [1, 1, 1]} : vector<18x18x4xbf16> to vector<16x16x4xbf16>
    %9 = vector.extract_strided_slice %1 {offsets = [2, 1, 0], sizes = [16, 16, 4], strides = [1, 1, 1]} : vector<18x18x4xbf16> to vector<16x16x4xbf16>
    %10 = vector.extract_strided_slice %1 {offsets = [2, 2, 0], sizes = [16, 16, 4], strides = [1, 1, 1]} : vector<18x18x4xbf16> to vector<16x16x4xbf16>
    %11 = tpu.concatenate %2, %3, %4, %5, %6, %7, %8, %9, %10 in 2 : vector<16x16x4xbf16>, vector<16x16x4xbf16>, vector<16x16x4xbf16>, vector<16x16x4xbf16>, vector<16x16x4xbf16>, vector<16x16x4xbf16>, vector<16x16x4xbf16>, vector<16x16x4xbf16>, vector<16x16x4xbf16> -> vector<16x16x36xbf16>
    %12 = vector.shape_cast %11 : vector<16x16x36xbf16> to vector<256x36xbf16>
    %c0_4 = arith.constant 0 : index
    %c0_5 = arith.constant 0 : index
    %13 = vector.load %arg3[%c0_4, %c0_5] : memref<36x32xbf16, #tpu.memory_space<vmem>>, vector<36x32xbf16>
    %cst = arith.constant dense<0.000000e+00> : vector<256x32xf32>
    %14 = tpu.matmul %12, %13, %cst {dimension_numbers = #tpu.dot_dimension_numbers<[1], [0], [0], [1], [0, 0, 1, 1], [], []>} : vector<256x36xbf16>, vector<36x32xbf16>, vector<256x32xf32> -> vector<256x32xf32>
    %c0_6 = arith.constant 0 : index
    %c0_7 = arith.constant 0 : index
    %15 = vector.load %arg4[%c0_6, %c0_7] : memref<2x32xf32, #tpu.memory_space<vmem>>, vector<1x32xf32>
    %16 = vector.broadcast %15 : vector<1x32xf32> to vector<256x32xf32>
    %17 = arith.mulf %14, %16 : vector<256x32xf32>
    %c1 = arith.constant 1 : index
    %c0_8 = arith.constant 0 : index
    %18 = vector.load %arg4[%c1, %c0_8] : memref<2x32xf32, #tpu.memory_space<vmem>>, vector<1x32xf32>
    %19 = vector.broadcast %18 : vector<1x32xf32> to vector<256x32xf32>
    %20 = arith.addf %17, %19 : vector<256x32xf32>
    %cst_9 = arith.constant 0.000000e+00 : f32
    %21 = vector.broadcast %cst_9 : f32 to vector<256x32xf32>
    %22 = arith.maximumf %20, %21 : vector<256x32xf32>
    %c0_10 = arith.constant 0 : index
    %c0_11 = arith.constant 0 : index
    %c0_12 = arith.constant 0 : index
    %c0_13 = arith.constant 0 : index
    %23 = vector.load %arg5[%c0_10, %c0_11, %c0_12, %c0_13] : memref<1x1x256x32xf32, #tpu.memory_space<vmem>>, vector<1x1x256x32xf32>
    %24 = vector.shape_cast %23 : vector<1x1x256x32xf32> to vector<256x32xf32>
    %25 = vector.shape_cast %22 : vector<256x32xf32> to vector<1x1x256x32xf32>
    tpu.vector_store %arg5[%c0_10, %c0_11, %c0_12, %c0_13], %25 {strides = array<i32>} : memref<1x1x256x32xf32, #tpu.memory_space<vmem>>, vector<1x1x256x32xf32>,
    return
  }
  func.func @transform_0(%arg0: i32, %arg1: i32) -> (i32, i32, i32, i32, i32) {
    %c0_i32 = arith.constant 0 : i32
    %c0_i32_0 = arith.constant 0 : i32
    %c0_i32_1 = arith.constant 0 : i32
    %c0_i32_2 = arith.constant 0 : i32
    return %arg0, %arg1, %c0_i32, %c0_i32_0, %c0_i32_1 : i32, i32, i32, i32, i32
  }
  func.func @transform_1(%arg0: i32, %arg1: i32) -> (i32, i32) {
    %c0_i32 = arith.constant 0 : i32
    %c0_i32_0 = arith.constant 0 : i32
    %c0_i32_1 = arith.constant 0 : i32
    return %c0_i32, %c0_i32_0 : i32, i32
  }
  func.func @transform_2(%arg0: i32, %arg1: i32) -> (i32, i32) {
    %c0_i32 = arith.constant 0 : i32
    %c0_i32_0 = arith.constant 0 : i32
    %c0_i32_1 = arith.constant 0 : i32
    return %c0_i32, %c0_i32_0 : i32, i32
  }
  func.func @transform_3(%arg0: i32, %arg1: i32) -> (i32, i32, i32, i32) {
    %c0_i32 = arith.constant 0 : i32
    %c0_i32_0 = arith.constant 0 : i32
    %c0_i32_1 = arith.constant 0 : i32
    return %arg0, %arg1, %c0_i32, %c0_i32_0 : i32, i32, i32, i32
  }
}

</mosaic_0001>

<llo_original>
// kernel: tile.17
$region0: #{tile.17}
  #allocation0 [shape = 's32[1]{0}', space=sflag, size = 0x4, scoped, tag = 'scoped memory for tile.17']
  %s0 = inlined_call_operand.vmem [shape: f32[8], index: 0, kind: input, shape index: {}]
  %s1 = inlined_call_operand.vmem [shape: f32[4,8], index: 1, kind: output, shape index: {}]
  // Predicated region
  $region2: #{tile.17} parent=0 // pred_check
    _
  $region3: #{tile.17} parent=0 // pred_check_branch
    %3 = sbr.rel (0) target = $region5
  $region4: #{tile.17} parent=0 // pred_region
    _
  $region5: #{tile.17} parent=0 // pred_fallthru
    _
  %v4 = vld [vmem:[%s0] ss:$0 sm:$0xff]
  %5 = vst [vmem:[%s1] sm:$0xf] %v4

// kernel: tile.19
$region0: #{tile.19}
  %s0 = inlined_call_operand.vmem [shape: f32[4,8], index: 0, kind: input, shape index: {}]
  %s1 = inlined_call_operand.vmem [shape: f32[1,32], index: 1, kind: output, shape index: {}]
  $region1: #{tile.19} parent=0
    #allocation0 [shape = 'u8[4096]{0}', space=vmem, size = 0x1000, scoped, tag = 'scoped mem for output reshape']
    #allocation1 [shape = 'u8[4096]{0}', space=vmem, size = 0x1000, scoped, tag = 'scoped mem for input reshape']
    %s3 = ssub.s32 16, 1
    %v4 = vld [vmem:[%s0] sm:%s3]
    %5 = vst [vmem:[#allocation1] sm:%s3] %v4
    %v6 = vld [vmem:[#allocation1] sm:$0x1]
    %vm7 = vcmask 64512
    %8 = vst.msk [vmem:[#allocation0] sm:$0x1] %vm7, %v6
    %s9 = scalar_lea.vmem [#allocation1], 3
    %v10 = vld [vmem:[%s9] sm:$0x1]
    %11 = vrot.lane.b32.xlu0 %v10, 24
    %v12 = vpop.permute.xlu0 %11
    %vm13 = vcmask 261312
    %14 = vst.msk [vmem:[#allocation0] sm:$0x1] %vm13, %v12
    %s15 = scalar_lea.vmem [#allocation1], 2
    %v16 = vld [vmem:[%s15] sm:$0x1]
    %17 = vrot.lane.b32.xlu0 %v16, 16
    %v18 = vpop.permute.xlu0 %17
    %vm19 = vcmask 195712
    %20 = vst.msk [vmem:[#allocation0] sm:$0x1] %vm19, %v18
    %s21 = scalar_lea.vmem [#allocation1], 1
    %v22 = vld [vmem:[%s21] sm:$0x1]
    %23 = vrot.lane.b32.xlu0 %v22, 8
    %v24 = vpop.permute.xlu0 %23
    %vm25 = vcmask 130112
    %26 = vst.msk [vmem:[#allocation0] sm:$0x1] %vm25, %v24
    %s28 = ssub.s32 2, 1
    %v29 = vld [vmem:[#allocation0] sm:%s28]
    %s31 = ssub.s32 2, 1
    %32 = vst [vmem:[%s1] sm:%s31] %v29

// kernel: upsampling_forward.2
$region0: #{upsampling_forward.2}
  #allocation0 [shape = 'u32[]', space=smem, size = 0x4, offset = 0x4, fixed_abs, tag = 'smem constant byte address 0x4 - core index']
  #allocation1 [shape = 'u32[72,128]{1,0:T(1,128)}', space=vmem, size = 0x9000, scoped, tag = 'internal scratch']
  %s0 = inlined_call_operand.vmem [shape: bf16[2,1,18,18,4], index: 0, kind: input, shape index: {}]
  %s1 = inlined_call_operand.vmem [shape: bf16[36,32], index: 1, kind: input, shape index: {}]
  %s2 = inlined_call_operand.vmem [shape: f32[2,1,2,32], index: 2, kind: output, shape index: {}]
  %s3 = sld [smem:[#allocation0]]
  $region41: #{upsampling_forward.2} parent=0
    _
  %s5 = ssub.s32 1, %s3
  %s6 = scalar_select 0, %s5, %s3
  loop: start=0, step=1, limit=4
  $region2: #{upsampling_forward.2} parent=0 // loop_pre_header
    _
  $region3: #{upsampling_forward.2} parent=0 // loop_header
    %s8 = sphi 0, %s12
    %p9 = scmp.ge.s32.totalorder %s8, 4
    %s15 = sphi 0, %s27
    %s16 = sphi 0, %s23
    %s17 = sphi 0, %s15
    %s18 = sphi 0, %s16
    %s19 = sphi 0, %s17
    %s20 = sphi 0, %s18
    %s32 = sphi 0, %s34
    %s35 = sphi 0, %s32
    %s36 = sphi 0, %s35
    %s52 = sphi 0, %s36
    %s56 = sphi 0, %s56
    %s58 = sphi 0, %s56
    %s59 = sphi 0, %s58
    %s73 = sphi 0, %s59
    %s81 = sphi 0, %s83
    %s84 = sphi 0, %s81
    %s85 = sphi 0, %s84
    %s101 = sphi 0, %s85
  $region4: #{upsampling_forward.2} parent=0 // loop_header_branch
    %11 = sbr.rel (%p9) target = $region8
  $region5: #{upsampling_forward.2} parent=0 // loop_body
    %s13 = ssub.s32 %s8, 1
    %s14 = ssub.s32 %s8, 2
    %s21 = sadd.s32 1, %s16
    %p22 = scmp.ge.s32.totalorder %s21, 1
    %s23 = scalar_select %p22, 0, %s21
    %s24 = sadd.s32 1, %s15
    %s25 = scalar_select %p22, %s24, %s15
    %p26 = scmp.ge.s32.totalorder %s25, 2
    %s27 = scalar_select %p26, 0, %s25
    %s28 = ssub.s32 %s15, %s27
    %s29 = ssub.s32 %s16, %s23
    %s30 = sor.u32 %s28, %s29
    %p31 = scmp.eq.s32.totalorder %s30, 0
    %s33 = sadd.s32 %s32, 1
    %s34 = scalar_select %p31, %s32, %s33
    %p37 = pneg %p31
    %p38 = scmp.eq.s32.totalorder %s8, 1
    %p39 = por %p37, %p38
    %p40 = scmp.ne.s32.totalorder %s32, %s35
    %p41 = scmp.eq.s32.totalorder %s8, 0
    %p42 = por %p40, %p41
    %p43 = scmp.ne.s32.totalorder %s32, %s35
    %p44 = scmp.eq.s32.totalorder %s13, 1
    %p45 = por %p43, %p44
    %p46 = scmp.ne.s32.totalorder %s35, %s36
    %p47 = scmp.eq.s32.totalorder %s13, 0
    %p48 = por %p46, %p47
    %p49 = scmp.ne.s32.totalorder %s35, %s36
    %p50 = scmp.eq.s32.totalorder %s14, 1
    %p51 = por %p49, %p50
    %p53 = scmp.ne.s32.totalorder %s36, %s52
    %p54 = scmp.eq.s32.totalorder %s14, 0
    %p55 = por %p53, %p54
    %s57 = sadd.s32 %s56, 1
    %p60 = scmp.eq.s32.totalorder %s8, 1
    %p61 = scmp.ne.s32.totalorder %s56, %s58
    %p62 = scmp.eq.s32.totalorder %s8, 0
    %p63 = por %p61, %p62
    %p64 = scmp.ne.s32.totalorder %s56, %s58
    %p65 = scmp.eq.s32.totalorder %s13, 1
    %p66 = por %p64, %p65
    %p67 = scmp.ne.s32.totalorder %s58, %s59
    %p68 = scmp.eq.s32.totalorder %s13, 0
    %p69 = por %p67, %p68
    %p70 = scmp.ne.s32.totalorder %s58, %s59
    %p71 = scmp.eq.s32.totalorder %s14, 1
    %p72 = por %p70, %p71
    %p74 = scmp.ne.s32.totalorder %s59, %s73
    %p75 = scmp.eq.s32.totalorder %s14, 0
    %p76 = por %p74, %p75
    %s77 = ssub.s32 %s15, %s27
    %s78 = ssub.s32 %s16, %s23
    %s79 = sor.u32 %s77, %s78
    %p80 = scmp.eq.s32.totalorder %s79, 0
    %s82 = sadd.s32 %s81, 1
    %s83 = scalar_select %p80, %s81, %s82
    %p86 = pneg %p80
    %p87 = scmp.eq.s32.totalorder %s8, 1
    %p88 = por %p86, %p87
    %p89 = scmp.ne.s32.totalorder %s81, %s84
    %p90 = scmp.eq.s32.totalorder %s8, 0
    %p91 = por %p89, %p90
    %p92 = scmp.ne.s32.totalorder %s81, %s84
    %p93 = scmp.eq.s32.totalorder %s13, 1
    %p94 = por %p92, %p93
    %p95 = scmp.ne.s32.totalorder %s84, %s85
    %p96 = scmp.eq.s32.totalorder %s13, 0
    %p97 = por %p95, %p96
    %p98 = scmp.ne.s32.totalorder %s84, %s85
    %p99 = scmp.eq.s32.totalorder %s14, 1
    %p100 = por %p98, %p99
    %p102 = scmp.ne.s32.totalorder %s85, %s101
    %p103 = scmp.eq.s32.totalorder %s14, 0
    %p104 = por %p102, %p103
    %p105 = scmp.le.s32.totalorder 1, %s8
    %p106 = scmp.lt.s32.totalorder %s8, 3
    %p107 = pnand %p105, %p106
    %p108 = pneg %p107
    // Predicated region
    $region9: #{upsampling_forward.2} parent=5 // pred_check
      _
    $region10: #{upsampling_forward.2} parent=5 // pred_check_branch
      %110 = sbr.rel (%p107) target = $region12
    $region11: #{upsampling_forward.2} parent=5 // pred_region
      %s111 = ssub.s32 %s8, 1
      // Predicated region
      $region13: #{upsampling_forward.2} parent=11 // pred_check
        %p112 = pneg %p69
      $region14: #{upsampling_forward.2} parent=11 // pred_check_branch
        %114 = sbr.rel (%p112) target = $region16
      $region15: #{upsampling_forward.2} parent=11 // pred_region
        _
      $region16: #{upsampling_forward.2} parent=11 // pred_fallthru
        _
    $region12: #{upsampling_forward.2} parent=5 // pred_fallthru
      _
    %p115 = scmp.lt.s32.totalorder %s8, 2
    // Predicated region
    $region17: #{upsampling_forward.2} parent=5 // pred_check
      %p116 = pneg %p115
    $region18: #{upsampling_forward.2} parent=5 // pred_check_branch
      %118 = sbr.rel (%p116) target = $region20
    $region19: #{upsampling_forward.2} parent=5 // pred_region
      // Predicated region
      $region21: #{upsampling_forward.2} parent=19 // pred_check
        %p119 = pneg %p42
      $region22: #{upsampling_forward.2} parent=19 // pred_check_branch
        %121 = sbr.rel (%p119) target = $region24
      $region23: #{upsampling_forward.2} parent=19 // pred_region
        %p122 = scmp.lt.s32.totalorder %s15, 1
        %s123 = scalar_select %p122, %s15, 1
        %p124 = scmp.lt.s32.totalorder %s16, 0
        %s125 = scalar_select %p124, %s16, 0
        %s126 = smul.addr %s125, 54
        %s127 = smul.addr %s123, 54
        %s128 = sadd.s32 %s126, %s127
        %s129 = smul.addr %s128, 4
        %s130 = scalar_lea.vmem %s0, %s129
      $region24: #{upsampling_forward.2} parent=19 // pred_fallthru
        _
    $region20: #{upsampling_forward.2} parent=5 // pred_fallthru
      _
    %p131 = scmp.le.s32.totalorder 1, %s8
    %p132 = scmp.lt.s32.totalorder %s8, 3
    %p133 = pnand %p131, %p132
    %p134 = pneg %p133
    // Predicated region
    $region25: #{upsampling_forward.2} parent=5 // pred_check
      _
    $region26: #{upsampling_forward.2} parent=5 // pred_check_branch
      %136 = sbr.rel (%p133) target = $region28
    $region27: #{upsampling_forward.2} parent=5 // pred_region
      %s137 = ssub.s32 %s8, 1
      %p138 = scmp.lt.s32.totalorder %s17, 1
      %s139 = scalar_select %p138, %s17, 1
      %p140 = scmp.lt.s32.totalorder %s18, 0
      %s141 = scalar_select %p140, %s18, 0
      %s142 = smul.addr %s141, 54
      %s143 = smul.addr %s139, 54
      %s144 = sadd.s32 %s142, %s143
      %s145 = smul.addr %s144, 4
      %s146 = scalar_lea.vmem %s0, %s145
      %p147 = pneg %p48
      %p148 = pneg %p45
      %p149 = pneg %p69
      %p150 = pneg %p66
      %p151 = pneg %p97
      %p152 = pneg %p94
      %p153 = scmp.lt.s32.totalorder %s17, 1
      %s154 = scalar_select %p153, %s17, 1
      %p155 = scmp.lt.s32.totalorder %s18, 0
      %s156 = scalar_select %p155, %s18, 0
      %s157 = sadd.s32 %s156, %s154
      %s158 = smul.addr %s157, 2
      %s159 = scalar_lea.vmem %s2, %s158
      %p160 = scmp.lt.s32.totalorder %s17, 1
      %s161 = scalar_select %p160, %s17, 1
      %p162 = scmp.lt.s32.totalorder %s18, 0
      %s163 = scalar_select %p162, %s18, 0
      %s164 = smul.addr %s163, 54
      %s165 = smul.addr %s161, 54
      %s166 = sadd.s32 %s164, %s165
      %s167 = smul.addr %s166, 4
      %s168 = scalar_lea.vmem %s0, %s167
      %p169 = scmp.lt.s32.totalorder %s17, 1
      %s170 = scalar_select %p169, %s17, 1
      %p171 = scmp.lt.s32.totalorder %s18, 0
      %s172 = scalar_select %p171, %s18, 0
      %s173 = sadd.s32 %s172, %s170
      %s174 = smul.addr %s173, 2
      %s175 = scalar_lea.vmem %s2, %s174
      %v177 = vld [vmem:[%s168] sm:$0xf]
      %v178 = vld [vmem:[%s168 + $0x4] sm:$0xf]
      %v179 = vld [vmem:[%s168 + $0x8] sm:$0x1]
      %v180 = vld [vmem:[%s168 + $0xc] sm:$0xf]
      %v181 = vld [vmem:[%s168 + $0x10] sm:$0xf]
      %v182 = vld [vmem:[%s168 + $0x14] sm:$0x1]
      %v183 = vld [vmem:[%s168 + $0x18] sm:$0xf]
      %v184 = vld [vmem:[%s168 + $0x1c] sm:$0xf]
      %v185 = vld [vmem:[%s168 + $0x20] sm:$0x1]
      %v186 = vld [vmem:[%s168 + $0x24] sm:$0xf]
      %v187 = vld [vmem:[%s168 + $0x28] sm:$0xf]
      %v188 = vld [vmem:[%s168 + $0x2c] sm:$0x1]
      %v189 = vld [vmem:[%s168 + $0x30] sm:$0xf]
      %v190 = vld [vmem:[%s168 + $0x34] sm:$0xf]
      %v191 = vld [vmem:[%s168 + $0x38] sm:$0x1]
      %v192 = vld [vmem:[%s168 + $0x3c] sm:$0xf]
      %v193 = vld [vmem:[%s168 + $0x40] sm:$0xf]
      %v194 = vld [vmem:[%s168 + $0x44] sm:$0x1]
      %v195 = vld [vmem:[%s168 + $0x48] sm:$0xf]
      %v196 = vld [vmem:[%s168 + $0x4c] sm:$0xf]
      %v197 = vld [vmem:[%s168 + $0x50] sm:$0x1]
      %v198 = vld [vmem:[%s168 + $0x54] sm:$0xf]
      %v199 = vld [vmem:[%s168 + $0x58] sm:$0xf]
      %v200 = vld [vmem:[%s168 + $0x5c] sm:$0x1]
      %v201 = vld [vmem:[%s168 + $0x60] sm:$0xf]
      %v202 = vld [vmem:[%s168 + $0x64] sm:$0xf]
      %v203 = vld [vmem:[%s168 + $0x68] sm:$0x1]
      %v204 = vld [vmem:[%s168 + $0x6c] sm:$0xf]
      %v205 = vld [vmem:[%s168 + $0x70] sm:$0xf]
      %v206 = vld [vmem:[%s168 + $0x74] sm:$0x1]
      %v207 = vld [vmem:[%s168 + $0x78] sm:$0xf]
      %v208 = vld [vmem:[%s168 + $0x7c] sm:$0xf]
      %v209 = vld [vmem:[%s168 + $0x80] sm:$0x1]
      %v210 = vld [vmem:[%s168 + $0x84] sm:$0xf]
      %v211 = vld [vmem:[%s168 + $0x88] sm:$0xf]
      %v212 = vld [vmem:[%s168 + $0x8c] sm:$0x1]
      %v213 = vld [vmem:[%s168 + $0x90] sm:$0xf]
      %v214 = vld [vmem:[%s168 + $0x94] sm:$0xf]
      %v215 = vld [vmem:[%s168 + $0x98] sm:$0x1]
      %v216 = vld [vmem:[%s168 + $0x9c] sm:$0xf]
      %v217 = vld [vmem:[%s168 + $0xa0] sm:$0xf]
      %v218 = vld [vmem:[%s168 + $0xa4] sm:$0x1]
      %v219 = vld [vmem:[%s168 + $0xa8] sm:$0xf]
      %v220 = vld [vmem:[%s168 + $0xac] sm:$0xf]
      %v221 = vld [vmem:[%s168 + $0xb0] sm:$0x1]
      %v222 = vld [vmem:[%s168 + $0xb4] sm:$0xf]
      %v223 = vld [vmem:[%s168 + $0xb8] sm:$0xf]
      %v224 = vld [vmem:[%s168 + $0xbc] sm:$0x1]
      %v225 = vld [vmem:[%s168 + $0xc0] sm:$0xf]
      %v226 = vld [vmem:[%s168 + $0xc4] sm:$0xf]
      %v227 = vld [vmem:[%s168 + $0xc8] sm:$0x1]
      %v228 = vld [vmem:[%s168 + $0xcc] sm:$0xf]
      %v229 = vld [vmem:[%s168 + $0xd0] sm:$0xf]
      %v230 = vld [vmem:[%s168 + $0xd4] sm:$0x1]
      %v263 = vunpack.c.l.b16 %v177
      %v264 = vunpack.c.l.b16 %v178
      %v265 = vunpack.c.l.b16 %v180
      %v266 = vunpack.c.l.b16 %v181
      %v267 = vunpack.c.l.b16 %v183
      %v268 = vunpack.c.l.b16 %v184
      %v269 = vunpack.c.l.b16 %v186
      %v270 = vunpack.c.l.b16 %v187
      %v271 = vunpack.c.l.b16 %v189
      %v272 = vunpack.c.l.b16 %v190
      %v273 = vunpack.c.l.b16 %v192
      %v274 = vunpack.c.l.b16 %v193
      %v275 = vunpack.c.l.b16 %v195
      %v276 = vunpack.c.l.b16 %v196
      %v277 = vunpack.c.l.b16 %v198
      %v278 = vunpack.c.l.b16 %v199
      %v279 = vunpack.c.l.b16 %v201
      %v280 = vunpack.c.l.b16 %v202
      %v281 = vunpack.c.l.b16 %v204
      %v282 = vunpack.c.l.b16 %v205
      %v283 = vunpack.c.l.b16 %v207
      %v284 = vunpack.c.l.b16 %v208
      %v285 = vunpack.c.l.b16 %v210
      %v286 = vunpack.c.l.b16 %v211
      %v287 = vunpack.c.l.b16 %v213
      %v288 = vunpack.c.l.b16 %v214
      %v289 = vunpack.c.l.b16 %v216
      %v290 = vunpack.c.l.b16 %v217
      %v291 = vunpack.c.l.b16 %v219
      %v292 = vunpack.c.l.b16 %v220
      %v293 = vunpack.c.l.b16 %v222
      %v294 = vunpack.c.l.b16 %v223
      %v295 = vpack.c.b16 %v264, %v263
      %v296 = vpack.c.b16 %v266, %v265
      %v297 = vpack.c.b16 %v268, %v267
      %v298 = vpack.c.b16 %v270, %v269
      %v299 = vpack.c.b16 %v272, %v271
      %v300 = vpack.c.b16 %v274, %v273
      %v301 = vpack.c.b16 %v276, %v275
      %v302 = vpack.c.b16 %v278, %v277
      %v303 = vpack.c.b16 %v280, %v279
      %v304 = vpack.c.b16 %v282, %v281
      %v305 = vpack.c.b16 %v284, %v283
      %v306 = vpack.c.b16 %v286, %v285
      %v307 = vpack.c.b16 %v288, %v287
      %v308 = vpack.c.b16 %v290, %v289
      %v309 = vpack.c.b16 %v292, %v291
      %v310 = vpack.c.b16 %v294, %v293
      %v327 = vunpack.c.l.b16 %v179
      %v328 = vunpack.c.l.b16 %v182
      %v329 = vunpack.c.l.b16 %v185
      %v330 = vunpack.c.l.b16 %v188
      %v331 = vunpack.c.l.b16 %v191
      %v332 = vunpack.c.l.b16 %v194
      %v333 = vunpack.c.l.b16 %v197
      %v334 = vunpack.c.l.b16 %v200
      %v335 = vunpack.c.l.b16 %v203
      %v336 = vunpack.c.l.b16 %v206
      %v337 = vunpack.c.l.b16 %v209
      %v338 = vunpack.c.l.b16 %v212
      %v339 = vunpack.c.l.b16 %v215
      %v340 = vunpack.c.l.b16 %v218
      %v341 = vunpack.c.l.b16 %v221
      %v342 = vunpack.c.l.b16 %v224
      %v343 = vpack.c.b16 %v327, %v327
      %v344 = vpack.c.b16 %v328, %v328
      %v345 = vpack.c.b16 %v329, %v329
      %v346 = vpack.c.b16 %v330, %v330
      %v347 = vpack.c.b16 %v331, %v331
      %v348 = vpack.c.b16 %v332, %v332
      %v349 = vpack.c.b16 %v333, %v333
      %v350 = vpack.c.b16 %v334, %v334
      %v351 = vpack.c.b16 %v335, %v335
      %v352 = vpack.c.b16 %v336, %v336
      %v353 = vpack.c.b16 %v337, %v337
      %v354 = vpack.c.b16 %v338, %v338
      %v355 = vpack.c.b16 %v339, %v339
      %v356 = vpack.c.b16 %v340, %v340
      %v357 = vpack.c.b16 %v341, %v341
      %v358 = vpack.c.b16 %v342, %v342
      %vm359 = vsmask.f32 7424
      %v361 = vshrl.u32 %v295, 16
      %v363 = vshll.u32 %v295, 16
      %v365 = vrot.slane %v363, 1
      %v366 = vor.u32 %v361, %v365
      %v368 = vshll.u32 %v343, 16
      %v370 = vrot.slane %v368, 1
      %v371 = vsel %vm359, %v366, %v370
      %v373 = vshrl.u32 %v296, 16
      %v375 = vshll.u32 %v296, 16
      %v377 = vrot.slane %v375, 1
      %v378 = vor.u32 %v373, %v377
      %v380 = vshll.u32 %v344, 16
      %v382 = vrot.slane %v380, 1
      %v383 = vsel %vm359, %v378, %v382
      %v385 = vshrl.u32 %v297, 16
      %v387 = vshll.u32 %v297, 16
      %v389 = vrot.slane %v387, 1
      %v390 = vor.u32 %v385, %v389
      %v392 = vshll.u32 %v345, 16
      %v394 = vrot.slane %v392, 1
      %v395 = vsel %vm359, %v390, %v394
      %v397 = vshrl.u32 %v298, 16
      %v399 = vshll.u32 %v298, 16
      %v401 = vrot.slane %v399, 1
      %v402 = vor.u32 %v397, %v401
      %v404 = vshll.u32 %v346, 16
      %v406 = vrot.slane %v404, 1
      %v407 = vsel %vm359, %v402, %v406
      %v409 = vshrl.u32 %v299, 16
      %v411 = vshll.u32 %v299, 16
      %v413 = vrot.slane %v411, 1
      %v414 = vor.u32 %v409, %v413
      %v416 = vshll.u32 %v347, 16
      %v418 = vrot.slane %v416, 1
      %v419 = vsel %vm359, %v414, %v418
      %v421 = vshrl.u32 %v300, 16
      %v423 = vshll.u32 %v300, 16
      %v425 = vrot.slane %v423, 1
      %v426 = vor.u32 %v421, %v425
      %v428 = vshll.u32 %v348, 16
      %v430 = vrot.slane %v428, 1
      %v431 = vsel %vm359, %v426, %v430
      %v433 = vshrl.u32 %v301, 16
      %v435 = vshll.u32 %v301, 16
      %v437 = vrot.slane %v435, 1
      %v438 = vor.u32 %v433, %v437
      %v440 = vshll.u32 %v349, 16
      %v442 = vrot.slane %v440, 1
      %v443 = vsel %vm359, %v438, %v442
      %v445 = vshrl.u32 %v302, 16
      %v447 = vshll.u32 %v302, 16
      %v449 = vrot.slane %v447, 1
      %v450 = vor.u32 %v445, %v449
      %v452 = vshll.u32 %v350, 16
      %v454 = vrot.slane %v452, 1
      %v455 = vsel %vm359, %v450, %v454
      %v457 = vshrl.u32 %v303, 16
      %v459 = vshll.u32 %v303, 16
      %v461 = vrot.slane %v459, 1
      %v462 = vor.u32 %v457, %v461
      %v464 = vshll.u32 %v351, 16
      %v466 = vrot.slane %v464, 1
      %v467 = vsel %vm359, %v462, %v466
      %v469 = vshrl.u32 %v304, 16
      %v471 = vshll.u32 %v304, 16
      %v473 = vrot.slane %v471, 1
      %v474 = vor.u32 %v469, %v473
      %v476 = vshll.u32 %v352, 16
      %v478 = vrot.slane %v476, 1
      %v479 = vsel %vm359, %v474, %v478
      %v481 = vshrl.u32 %v305, 16
      %v483 = vshll.u32 %v305, 16
      %v485 = vrot.slane %v483, 1
      %v486 = vor.u32 %v481, %v485
      %v488 = vshll.u32 %v353, 16
      %v490 = vrot.slane %v488, 1
      %v491 = vsel %vm359, %v486, %v490
      %v493 = vshrl.u32 %v306, 16
      %v495 = vshll.u32 %v306, 16
      %v497 = vrot.slane %v495, 1
      %v498 = vor.u32 %v493, %v497
      %v500 = vshll.u32 %v354, 16
      %v502 = vrot.slane %v500, 1
      %v503 = vsel %vm359, %v498, %v502
      %v505 = vshrl.u32 %v307, 16
      %v507 = vshll.u32 %v307, 16
      %v509 = vrot.slane %v507, 1
      %v510 = vor.u32 %v505, %v509
      %v512 = vshll.u32 %v355, 16
      %v514 = vrot.slane %v512, 1
      %v515 = vsel %vm359, %v510, %v514
      %v517 = vshrl.u32 %v308, 16
      %v519 = vshll.u32 %v308, 16
      %v521 = vrot.slane %v519, 1
      %v522 = vor.u32 %v517, %v521
      %v524 = vshll.u32 %v356, 16
      %v526 = vrot.slane %v524, 1
      %v527 = vsel %vm359, %v522, %v526
      %v529 = vshrl.u32 %v309, 16
      %v531 = vshll.u32 %v309, 16
      %v533 = vrot.slane %v531, 1
      %v534 = vor.u32 %v529, %v533
      %v536 = vshll.u32 %v357, 16
      %v538 = vrot.slane %v536, 1
      %v539 = vsel %vm359, %v534, %v538
      %v541 = vshrl.u32 %v310, 16
      %v543 = vshll.u32 %v310, 16
      %v545 = vrot.slane %v543, 1
      %v546 = vor.u32 %v541, %v545
      %v548 = vshll.u32 %v358, 16
      %v550 = vrot.slane %v548, 1
      %v551 = vsel %vm359, %v546, %v550
      %552 = vrot.lane.b32.xlu0 %v371, 4
      %v553 = vpop.permute.xlu0 %552
      %554 = vrot.lane.b32.xlu0 %v383, 4
      %v555 = vpop.permute.xlu0 %554
      %556 = vrot.lane.b32.xlu0 %v395, 4
      %v557 = vpop.permute.xlu0 %556
      %558 = vrot.lane.b32.xlu0 %v407, 4
      %v559 = vpop.permute.xlu0 %558
      %560 = vrot.lane.b32.xlu0 %v419, 4
      %v561 = vpop.permute.xlu0 %560
      %562 = vrot.lane.b32.xlu0 %v431, 4
      %v563 = vpop.permute.xlu0 %562
      %564 = vrot.lane.b32.xlu0 %v443, 4
      %v565 = vpop.permute.xlu0 %564
      %566 = vrot.lane.b32.xlu0 %v455, 4
      %v567 = vpop.permute.xlu0 %566
      %568 = vrot.lane.b32.xlu0 %v467, 4
      %v569 = vpop.permute.xlu0 %568
      %570 = vrot.lane.b32.xlu0 %v479, 4
      %v571 = vpop.permute.xlu0 %570
      %572 = vrot.lane.b32.xlu0 %v491, 4
      %v573 = vpop.permute.xlu0 %572
      %574 = vrot.lane.b32.xlu0 %v503, 4
      %v575 = vpop.permute.xlu0 %574
      %576 = vrot.lane.b32.xlu0 %v515, 4
      %v577 = vpop.permute.xlu0 %576
      %578 = vrot.lane.b32.xlu0 %v527, 4
      %v579 = vpop.permute.xlu0 %578
      %580 = vrot.lane.b32.xlu0 %v539, 4
      %v581 = vpop.permute.xlu0 %580
      %582 = vrot.lane.b32.xlu0 %v551, 4
      %v583 = vpop.permute.xlu0 %582
      %vm584 = vcmask 1046528
      %v585 = vrot.slane %v295, 1
      %v586 = vrot.slane %v343, 1
      %v587 = vsel %vm584, %v585, %v586
      %v588 = vrot.slane %v296, 1
      %v589 = vrot.slane %v344, 1
      %v590 = vsel %vm584, %v588, %v589
      %v591 = vrot.slane %v297, 1
      %v592 = vrot.slane %v345, 1
      %v593 = vsel %vm584, %v591, %v592
      %v594 = vrot.slane %v298, 1
      %v595 = vrot.slane %v346, 1
      %v596 = vsel %vm584, %v594, %v595
      %v597 = vrot.slane %v299, 1
      %v598 = vrot.slane %v347, 1
      %v599 = vsel %vm584, %v597, %v598
      %v600 = vrot.slane %v300, 1
      %v601 = vrot.slane %v348, 1
      %v602 = vsel %vm584, %v600, %v601
      %v603 = vrot.slane %v301, 1
      %v604 = vrot.slane %v349, 1
      %v605 = vsel %vm584, %v603, %v604
      %v606 = vrot.slane %v302, 1
      %v607 = vrot.slane %v350, 1
      %v608 = vsel %vm584, %v606, %v607
      %v609 = vrot.slane %v303, 1
      %v610 = vrot.slane %v351, 1
      %v611 = vsel %vm584, %v609, %v610
      %v612 = vrot.slane %v304, 1
      %v613 = vrot.slane %v352, 1
      %v614 = vsel %vm584, %v612, %v613
      %v615 = vrot.slane %v305, 1
      %v616 = vrot.slane %v353, 1
      %v617 = vsel %vm584, %v615, %v616
      %v618 = vrot.slane %v306, 1
      %v619 = vrot.slane %v354, 1
      %v620 = vsel %vm584, %v618, %v619
      %v621 = vrot.slane %v307, 1
      %v622 = vrot.slane %v355, 1
      %v623 = vsel %vm584, %v621, %v622
      %v624 = vrot.slane %v308, 1
      %v625 = vrot.slane %v356, 1
      %v626 = vsel %vm584, %v624, %v625
      %v627 = vrot.slane %v309, 1
      %v628 = vrot.slane %v357, 1
      %v629 = vsel %vm584, %v627, %v628
      %v630 = vrot.slane %v310, 1
      %v631 = vrot.slane %v358, 1
      %v632 = vsel %vm584, %v630, %v631
      %633 = vrot.lane.b32.xlu0 %v587, 8
      %v634 = vpop.permute.xlu0 %633
      %635 = vrot.lane.b32.xlu0 %v590, 8
      %v636 = vpop.permute.xlu0 %635
      %637 = vrot.lane.b32.xlu0 %v593, 8
      %v638 = vpop.permute.xlu0 %637
      %639 = vrot.lane.b32.xlu0 %v596, 8
      %v640 = vpop.permute.xlu0 %639
      %641 = vrot.lane.b32.xlu0 %v599, 8
      %v642 = vpop.permute.xlu0 %641
      %643 = vrot.lane.b32.xlu0 %v602, 8
      %v644 = vpop.permute.xlu0 %643
      %645 = vrot.lane.b32.xlu0 %v605, 8
      %v646 = vpop.permute.xlu0 %645
      %647 = vrot.lane.b32.xlu0 %v608, 8
      %v648 = vpop.permute.xlu0 %647
      %649 = vrot.lane.b32.xlu0 %v611, 8
      %v650 = vpop.permute.xlu0 %649
      %651 = vrot.lane.b32.xlu0 %v614, 8
      %v652 = vpop.permute.xlu0 %651
      %653 = vrot.lane.b32.xlu0 %v617, 8
      %v654 = vpop.permute.xlu0 %653
      %655 = vrot.lane.b32.xlu0 %v620, 8
      %v656 = vpop.permute.xlu0 %655
      %657 = vrot.lane.b32.xlu0 %v623, 8
      %v658 = vpop.permute.xlu0 %657
      %659 = vrot.lane.b32.xlu0 %v626, 8
      %v660 = vpop.permute.xlu0 %659
      %661 = vrot.lane.b32.xlu0 %v629, 8
      %v662 = vpop.permute.xlu0 %661
      %663 = vrot.lane.b32.xlu0 %v632, 8
      %v664 = vpop.permute.xlu0 %663
      %v667 = vunpack.c.l.b16 %v225
      %v668 = vunpack.c.l.b16 %v226
      %v669 = vpack.c.b16 %v668, %v667
      %670 = vrot.lane.b32.xlu0 %v296, 12
      %v671 = vpop.permute.xlu0 %670
      %672 = vrot.lane.b32.xlu0 %v297, 12
      %v673 = vpop.permute.xlu0 %672
      %674 = vrot.lane.b32.xlu0 %v298, 12
      %v675 = vpop.permute.xlu0 %674
      %676 = vrot.lane.b32.xlu0 %v299, 12
      %v677 = vpop.permute.xlu0 %676
      %678 = vrot.lane.b32.xlu0 %v300, 12
      %v679 = vpop.permute.xlu0 %678
      %680 = vrot.lane.b32.xlu0 %v301, 12
      %v681 = vpop.permute.xlu0 %680
      %682 = vrot.lane.b32.xlu0 %v302, 12
      %v683 = vpop.permute.xlu0 %682
      %684 = vrot.lane.b32.xlu0 %v303, 12
      %v685 = vpop.permute.xlu0 %684
      %686 = vrot.lane.b32.xlu0 %v304, 12
      %v687 = vpop.permute.xlu0 %686
      %688 = vrot.lane.b32.xlu0 %v305, 12
      %v689 = vpop.permute.xlu0 %688
      %690 = vrot.lane.b32.xlu0 %v306, 12
      %v691 = vpop.permute.xlu0 %690
      %692 = vrot.lane.b32.xlu0 %v307, 12
      %v693 = vpop.permute.xlu0 %692
      %694 = vrot.lane.b32.xlu0 %v308, 12
      %v695 = vpop.permute.xlu0 %694
      %696 = vrot.lane.b32.xlu0 %v309, 12
      %v697 = vpop.permute.xlu0 %696
      %698 = vrot.lane.b32.xlu0 %v310, 12
      %v699 = vpop.permute.xlu0 %698
      %700 = vrot.lane.b32.xlu0 %v669, 12
      %v701 = vpop.permute.xlu0 %700
      %v703 = vunpack.c.l.b16 %v227
      %v704 = vpack.c.b16 %v703, %v703
      %v706 = vshrl.u32 %v669, 16
      %v708 = vshll.u32 %v669, 16
      %v710 = vrot.slane %v708, 1
      %v711 = vor.u32 %v706, %v710
      %v713 = vshll.u32 %v704, 16
      %v715 = vrot.slane %v713, 1
      %v716 = vsel %vm359, %v711, %v715
      %717 = vrot.lane.b32.xlu0 %v383, 16
      %v718 = vpop.permute.xlu0 %717
      %719 = vrot.lane.b32.xlu0 %v395, 16
      %v720 = vpop.permute.xlu0 %719
      %721 = vrot.lane.b32.xlu0 %v407, 16
      %v722 = vpop.permute.xlu0 %721
      %723 = vrot.lane.b32.xlu0 %v419, 16
      %v724 = vpop.permute.xlu0 %723
      %725 = vrot.lane.b32.xlu0 %v431, 16
      %v726 = vpop.permute.xlu0 %725
      %727 = vrot.lane.b32.xlu0 %v443, 16
      %v728 = vpop.permute.xlu0 %727
      %729 = vrot.lane.b32.xlu0 %v455, 16
      %v730 = vpop.permute.xlu0 %729
      %731 = vrot.lane.b32.xlu0 %v467, 16
      %v732 = vpop.permute.xlu0 %731
      %733 = vrot.lane.b32.xlu0 %v479, 16
      %v734 = vpop.permute.xlu0 %733
      %735 = vrot.lane.b32.xlu0 %v491, 16
      %v736 = vpop.permute.xlu0 %735
      %737 = vrot.lane.b32.xlu0 %v503, 16
      %v738 = vpop.permute.xlu0 %737
      %739 = vrot.lane.b32.xlu0 %v515, 16
      %v740 = vpop.permute.xlu0 %739
      %741 = vrot.lane.b32.xlu0 %v527, 16
      %v742 = vpop.permute.xlu0 %741
      %743 = vrot.lane.b32.xlu0 %v539, 16
      %v744 = vpop.permute.xlu0 %743
      %745 = vrot.lane.b32.xlu0 %v551, 16
      %v746 = vpop.permute.xlu0 %745
      %747 = vrot.lane.b32.xlu0 %v716, 16
      %v748 = vpop.permute.xlu0 %747
      %v749 = vrot.slane %v669, 1
      %v750 = vrot.slane %v704, 1
      %v751 = vsel %vm584, %v749, %v750
      %752 = vrot.lane.b32.xlu0 %v590, 20
      %v753 = vpop.permute.xlu0 %752
      %754 = vrot.lane.b32.xlu0 %v593, 20
      %v755 = vpop.permute.xlu0 %754
      %756 = vrot.lane.b32.xlu0 %v596, 20
      %v757 = vpop.permute.xlu0 %756
      %758 = vrot.lane.b32.xlu0 %v599, 20
      %v759 = vpop.permute.xlu0 %758
      %760 = vrot.lane.b32.xlu0 %v602, 20
      %v761 = vpop.permute.xlu0 %760
      %762 = vrot.lane.b32.xlu0 %v605, 20
      %v763 = vpop.permute.xlu0 %762
      %764 = vrot.lane.b32.xlu0 %v608, 20
      %v765 = vpop.permute.xlu0 %764
      %766 = vrot.lane.b32.xlu0 %v611, 20
      %v767 = vpop.permute.xlu0 %766
      %768 = vrot.lane.b32.xlu0 %v614, 20
      %v769 = vpop.permute.xlu0 %768
      %770 = vrot.lane.b32.xlu0 %v617, 20
      %v771 = vpop.permute.xlu0 %770
      %772 = vrot.lane.b32.xlu0 %v620, 20
      %v773 = vpop.permute.xlu0 %772
      %774 = vrot.lane.b32.xlu0 %v623, 20
      %v775 = vpop.permute.xlu0 %774
      %776 = vrot.lane.b32.xlu0 %v626, 20
      %v777 = vpop.permute.xlu0 %776
      %778 = vrot.lane.b32.xlu0 %v629, 20
      %v779 = vpop.permute.xlu0 %778
      %780 = vrot.lane.b32.xlu0 %v632, 20
      %v781 = vpop.permute.xlu0 %780
      %782 = vrot.lane.b32.xlu0 %v751, 20
      %v783 = vpop.permute.xlu0 %782
      %v786 = vunpack.c.l.b16 %v228
      %v787 = vunpack.c.l.b16 %v229
      %v788 = vpack.c.b16 %v787, %v786
      %789 = vrot.lane.b32.xlu0 %v297, 24
      %v790 = vpop.permute.xlu0 %789
      %791 = vrot.lane.b32.xlu0 %v298, 24
      %v792 = vpop.permute.xlu0 %791
      %793 = vrot.lane.b32.xlu0 %v299, 24
      %v794 = vpop.permute.xlu0 %793
      %795 = vrot.lane.b32.xlu0 %v300, 24
      %v796 = vpop.permute.xlu0 %795
      %797 = vrot.lane.b32.xlu0 %v301, 24
      %v798 = vpop.permute.xlu0 %797
      %799 = vrot.lane.b32.xlu0 %v302, 24
      %v800 = vpop.permute.xlu0 %799
      %801 = vrot.lane.b32.xlu0 %v303, 24
      %v802 = vpop.permute.xlu0 %801
      %803 = vrot.lane.b32.xlu0 %v304, 24
      %v804 = vpop.permute.xlu0 %803
      %805 = vrot.lane.b32.xlu0 %v305, 24
      %v806 = vpop.permute.xlu0 %805
      %807 = vrot.lane.b32.xlu0 %v306, 24
      %v808 = vpop.permute.xlu0 %807
      %809 = vrot.lane.b32.xlu0 %v307, 24
      %v810 = vpop.permute.xlu0 %809
      %811 = vrot.lane.b32.xlu0 %v308, 24
      %v812 = vpop.permute.xlu0 %811
      %813 = vrot.lane.b32.xlu0 %v309, 24
      %v814 = vpop.permute.xlu0 %813
      %815 = vrot.lane.b32.xlu0 %v310, 24
      %v816 = vpop.permute.xlu0 %815
      %817 = vrot.lane.b32.xlu0 %v669, 24
      %v818 = vpop.permute.xlu0 %817
      %819 = vrot.lane.b32.xlu0 %v788, 24
      %v820 = vpop.permute.xlu0 %819
      %v822 = vunpack.c.l.b16 %v230
      %v823 = vpack.c.b16 %v822, %v822
      %v825 = vshrl.u32 %v788, 16
      %v827 = vshll.u32 %v788, 16
      %v829 = vrot.slane %v827, 1
      %v830 = vor.u32 %v825, %v829
      %v832 = vshll.u32 %v823, 16
      %v834 = vrot.slane %v832, 1
      %v835 = vsel %vm359, %v830, %v834
      %836 = vrot.lane.b32.xlu0 %v395, 28
      %v837 = vpop.permute.xlu0 %836
      %838 = vrot.lane.b32.xlu0 %v407, 28
      %v839 = vpop.permute.xlu0 %838
      %840 = vrot.lane.b32.xlu0 %v419, 28
      %v841 = vpop.permute.xlu0 %840
      %842 = vrot.lane.b32.xlu0 %v431, 28
      %v843 = vpop.permute.xlu0 %842
      %844 = vrot.lane.b32.xlu0 %v443, 28
      %v845 = vpop.permute.xlu0 %844
      %846 = vrot.lane.b32.xlu0 %v455, 28
      %v847 = vpop.permute.xlu0 %846
      %848 = vrot.lane.b32.xlu0 %v467, 28
      %v849 = vpop.permute.xlu0 %848
      %850 = vrot.lane.b32.xlu0 %v479, 28
      %v851 = vpop.permute.xlu0 %850
      %852 = vrot.lane.b32.xlu0 %v491, 28
      %v853 = vpop.permute.xlu0 %852
      %854 = vrot.lane.b32.xlu0 %v503, 28
      %v855 = vpop.permute.xlu0 %854
      %856 = vrot.lane.b32.xlu0 %v515, 28
      %v857 = vpop.permute.xlu0 %856
      %858 = vrot.lane.b32.xlu0 %v527, 28
      %v859 = vpop.permute.xlu0 %858
      %860 = vrot.lane.b32.xlu0 %v539, 28
      %v861 = vpop.permute.xlu0 %860
      %862 = vrot.lane.b32.xlu0 %v551, 28
      %v863 = vpop.permute.xlu0 %862
      %864 = vrot.lane.b32.xlu0 %v716, 28
      %v865 = vpop.permute.xlu0 %864
      %866 = vrot.lane.b32.xlu0 %v835, 28
      %v867 = vpop.permute.xlu0 %866
      %v868 = vrot.slane %v788, 1
      %v869 = vrot.slane %v823, 1
      %v870 = vsel %vm584, %v868, %v869
      %871 = vrot.lane.b32.xlu0 %v593, 32
      %v872 = vpop.permute.xlu0 %871
      %873 = vrot.lane.b32.xlu0 %v596, 32
      %v874 = vpop.permute.xlu0 %873
      %875 = vrot.lane.b32.xlu0 %v599, 32
      %v876 = vpop.permute.xlu0 %875
      %877 = vrot.lane.b32.xlu0 %v602, 32
      %v878 = vpop.permute.xlu0 %877
      %879 = vrot.lane.b32.xlu0 %v605, 32
      %v880 = vpop.permute.xlu0 %879
      %881 = vrot.lane.b32.xlu0 %v608, 32
      %v882 = vpop.permute.xlu0 %881
      %883 = vrot.lane.b32.xlu0 %v611, 32
      %v884 = vpop.permute.xlu0 %883
      %885 = vrot.lane.b32.xlu0 %v614, 32
      %v886 = vpop.permute.xlu0 %885
      %887 = vrot.lane.b32.xlu0 %v617, 32
      %v888 = vpop.permute.xlu0 %887
      %889 = vrot.lane.b32.xlu0 %v620, 32
      %v890 = vpop.permute.xlu0 %889
      %891 = vrot.lane.b32.xlu0 %v623, 32
      %v892 = vpop.permute.xlu0 %891
      %893 = vrot.lane.b32.xlu0 %v626, 32
      %v894 = vpop.permute.xlu0 %893
      %895 = vrot.lane.b32.xlu0 %v629, 32
      %v896 = vpop.permute.xlu0 %895
      %897 = vrot.lane.b32.xlu0 %v632, 32
      %v898 = vpop.permute.xlu0 %897
      %899 = vrot.lane.b32.xlu0 %v751, 32
      %v900 = vpop.permute.xlu0 %899
      %901 = vrot.lane.b32.xlu0 %v870, 32
      %v902 = vpop.permute.xlu0 %901
      %vm903 = vcmask 31744
      %v905 = vsel %vm903, %v295, %v553
      %v907 = vsel %vm903, %v296, %v555
      %v909 = vsel %vm903, %v297, %v557
      %v911 = vsel %vm903, %v298, %v559
      %v913 = vsel %vm903, %v299, %v561
      %v915 = vsel %vm903, %v300, %v563
      %v917 = vsel %vm903, %v301, %v565
      %v919 = vsel %vm903, %v302, %v567
      %v921 = vsel %vm903, %v303, %v569
      %v923 = vsel %vm903, %v304, %v571
      %v925 = vsel %vm903, %v305, %v573
      %v927 = vsel %vm903, %v306, %v575
      %v929 = vsel %vm903, %v307, %v577
      %v931 = vsel %vm903, %v308, %v579
      %v933 = vsel %vm903, %v309, %v581
      %v935 = vsel %vm903, %v310, %v583
      %vm936 = vcmask 64512
      %v938 = vsel %vm936, %v905, %v634
      %v940 = vsel %vm936, %v907, %v636
      %v942 = vsel %vm936, %v909, %v638
      %v944 = vsel %vm936, %v911, %v640
      %v946 = vsel %vm936, %v913, %v642
      %v948 = vsel %vm936, %v915, %v644
      %v950 = vsel %vm936, %v917, %v646
      %v952 = vsel %vm936, %v919, %v648
      %v954 = vsel %vm936, %v921, %v650
      %v956 = vsel %vm936, %v923, %v652
      %v958 = vsel %vm936, %v925, %v654
      %v960 = vsel %vm936, %v927, %v656
      %v962 = vsel %vm936, %v929, %v658
      %v964 = vsel %vm936, %v931, %v660
      %v966 = vsel %vm936, %v933, %v662
      %v968 = vsel %vm936, %v935, %v664
      %vm969 = vcmask 97280
      %v971 = vsel %vm969, %v938, %v671
      %v973 = vsel %vm969, %v940, %v673
      %v975 = vsel %vm969, %v942, %v675
      %v977 = vsel %vm969, %v944, %v677
      %v979 = vsel %vm969, %v946, %v679
      %v981 = vsel %vm969, %v948, %v681
      %v983 = vsel %vm969, %v950, %v683
      %v985 = vsel %vm969, %v952, %v685
      %v987 = vsel %vm969, %v954, %v687
      %v989 = vsel %vm969, %v956, %v689
      %v991 = vsel %vm969, %v958, %v691
      %v993 = vsel %vm969, %v960, %v693
      %v995 = vsel %vm969, %v962, %v695
      %v997 = vsel %vm969, %v964, %v697
      %v999 = vsel %vm969, %v966, %v699
      %v1001 = vsel %vm969, %v968, %v701
      %vm1002 = vcmask 130048
      %v1004 = vsel %vm1002, %v971, %v718
      %v1006 = vsel %vm1002, %v973, %v720
      %v1008 = vsel %vm1002, %v975, %v722
      %v1010 = vsel %vm1002, %v977, %v724
      %v1012 = vsel %vm1002, %v979, %v726
      %v1014 = vsel %vm1002, %v981, %v728
      %v1016 = vsel %vm1002, %v983, %v730
      %v1018 = vsel %vm1002, %v985, %v732
      %v1020 = vsel %vm1002, %v987, %v734
      %v1022 = vsel %vm1002, %v989, %v736
      %v1024 = vsel %vm1002, %v991, %v738
      %v1026 = vsel %vm1002, %v993, %v740
      %v1028 = vsel %vm1002, %v995, %v742
      %v1030 = vsel %vm1002, %v997, %v744
      %v1032 = vsel %vm1002, %v999, %v746
      %v1034 = vsel %vm1002, %v1001, %v748
      %vm1035 = vcmask 162816
      %v1037 = vsel %vm1035, %v1004, %v753
      %v1039 = vsel %vm1035, %v1006, %v755
      %v1041 = vsel %vm1035, %v1008, %v757
      %v1043 = vsel %vm1035, %v1010, %v759
      %v1045 = vsel %vm1035, %v1012, %v761
      %v1047 = vsel %vm1035, %v1014, %v763
      %v1049 = vsel %vm1035, %v1016, %v765
      %v1051 = vsel %vm1035, %v1018, %v767
      %v1053 = vsel %vm1035, %v1020, %v769
      %v1055 = vsel %vm1035, %v1022, %v771
      %v1057 = vsel %vm1035, %v1024, %v773
      %v1059 = vsel %vm1035, %v1026, %v775
      %v1061 = vsel %vm1035, %v1028, %v777
      %v1063 = vsel %vm1035, %v1030, %v779
      %v1065 = vsel %vm1035, %v1032, %v781
      %v1067 = vsel %vm1035, %v1034, %v783
      %vm1068 = vcmask 195584
      %v1070 = vsel %vm1068, %v1037, %v790
      %v1072 = vsel %vm1068, %v1039, %v792
      %v1074 = vsel %vm1068, %v1041, %v794
      %v1076 = vsel %vm1068, %v1043, %v796
      %v1078 = vsel %vm1068, %v1045, %v798
      %v1080 = vsel %vm1068, %v1047, %v800
      %v1082 = vsel %vm1068, %v1049, %v802
      %v1084 = vsel %vm1068, %v1051, %v804
      %v1086 = vsel %vm1068, %v1053, %v806
      %v1088 = vsel %vm1068, %v1055, %v808
      %v1090 = vsel %vm1068, %v1057, %v810
      %v1092 = vsel %vm1068, %v1059, %v812
      %v1094 = vsel %vm1068, %v1061, %v814
      %v1096 = vsel %vm1068, %v1063, %v816
      %v1098 = vsel %vm1068, %v1065, %v818
      %v1100 = vsel %vm1068, %v1067, %v820
      %vm1101 = vcmask 228352
      %v1103 = vsel %vm1101, %v1070, %v837
      %v1105 = vsel %vm1101, %v1072, %v839
      %v1107 = vsel %vm1101, %v1074, %v841
      %v1109 = vsel %vm1101, %v1076, %v843
      %v1111 = vsel %vm1101, %v1078, %v845
      %v1113 = vsel %vm1101, %v1080, %v847
      %v1115 = vsel %vm1101, %v1082, %v849
      %v1117 = vsel %vm1101, %v1084, %v851
      %v1119 = vsel %vm1101, %v1086, %v853
      %v1121 = vsel %vm1101, %v1088, %v855
      %v1123 = vsel %vm1101, %v1090, %v857
      %v1125 = vsel %vm1101, %v1092, %v859
      %v1127 = vsel %vm1101, %v1094, %v861
      %v1129 = vsel %vm1101, %v1096, %v863
      %v1131 = vsel %vm1101, %v1098, %v865
      %v1133 = vsel %vm1101, %v1100, %v867
      %vm1134 = vcmask 261120
      %v1136 = vsel %vm1134, %v1103, %v872
      %v1138 = vsel %vm1134, %v1105, %v874
      %v1140 = vsel %vm1134, %v1107, %v876
      %v1142 = vsel %vm1134, %v1109, %v878
      %v1144 = vsel %vm1134, %v1111, %v880
      %v1146 = vsel %vm1134, %v1113, %v882
      %v1148 = vsel %vm1134, %v1115, %v884
      %v1150 = vsel %vm1134, %v1117, %v886
      %v1152 = vsel %vm1134, %v1119, %v888
      %v1154 = vsel %vm1134, %v1121, %v890
      %v1156 = vsel %vm1134, %v1123, %v892
      %v1158 = vsel %vm1134, %v1125, %v894
      %v1160 = vsel %vm1134, %v1127, %v896
      %v1162 = vsel %vm1134, %v1129, %v898
      %v1164 = vsel %vm1134, %v1131, %v900
      %v1166 = vsel %vm1134, %v1133, %v902
      %v1167 = vld [vmem:[%s1] sm:$0xf]
      %v1168 = vld [vmem:[%s1 + $0x4] sm:$0xf]
      %v1169 = vld [vmem:[%s1 + $0x8] sm:$0xf]
      %v1170 = vld [vmem:[%s1 + $0xc] sm:$0xf]
      %v1171 = vld [vmem:[%s1 + $0x10] sm:$0x3]
      %v1177 = vunpack.c.l.b16 %v1167
      %v1178 = vunpack.c.l.b16 %v1168
      %v1179 = vunpack.c.l.b16 %v1169
      %v1180 = vunpack.c.l.b16 %v1170
      %v1181 = vunpack.c.l.b16 %v1171
      %v1182 = vpack.c.b16 %v1178, %v1177
      %v1183 = vpack.c.b16 %v1180, %v1179
      %v1184 = vpack.c.b16 %v1181, %v1181
      %vm1187 = vcmask 293888
      %v1188 = vsel %vm1187, %v1136, 0
      %v1190 = vsel %vm1187, %v1138, 0
      %v1192 = vsel %vm1187, %v1140, 0
      %v1194 = vsel %vm1187, %v1142, 0
      %v1196 = vsel %vm1187, %v1144, 0
      %v1198 = vsel %vm1187, %v1146, 0
      %v1200 = vsel %vm1187, %v1148, 0
      %v1202 = vsel %vm1187, %v1150, 0
      %v1204 = vsel %vm1187, %v1152, 0
      %v1206 = vsel %vm1187, %v1154, 0
      %v1208 = vsel %vm1187, %v1156, 0
      %v1210 = vsel %vm1187, %v1158, 0
      %v1212 = vsel %vm1187, %v1160, 0
      %v1214 = vsel %vm1187, %v1162, 0
      %v1216 = vsel %vm1187, %v1164, 0
      %v1218 = vsel %vm1187, %v1166, 0
      %vm1220 = vcmask 1041408
      %v1222 = vsel %vm1220, %v1184, 0
      %1224 = vmatpush.bf16.msra.mxu0 0
      %1225 = vmatpush.bf16.msra.mxu0 0
      %1226 = vmatpush.bf16.msra.mxu0 0
      %1227 = vmatpush.bf16.msra.mxu0 0
      %1228 = vmatpush.bf16.msra.mxu0 0
      %1229 = vmatpush.bf16.msra.mxu0 %v1222
      %1230 = vmatpush.bf16.msra.mxu0 %v1183
      %1231 = vmatpush.bf16.msra.mxu0 %v1182
      %1232 = vmatmul.bf16.gmra.mxu0 %v1188
      %v1233 = vpop.f32.mrf.mxu0
      %v1234 = vadd.f32 0.0, %v1233
      %v1235 = vpop.f32.mrf.mxu0
      %v1236 = vadd.f32 0.0, %v1235
      %1237 = vmatmul.bf16.gmra.mxu0 %v1190
      %v1238 = vpop.f32.mrf.mxu0
      %v1239 = vadd.f32 0.0, %v1238
      %v1240 = vpop.f32.mrf.mxu0
      %v1241 = vadd.f32 0.0, %v1240
      %1242 = vmatmul.bf16.gmra.mxu0 %v1192
      %v1243 = vpop.f32.mrf.mxu0
      %v1244 = vadd.f32 0.0, %v1243
      %v1245 = vpop.f32.mrf.mxu0
      %v1246 = vadd.f32 0.0, %v1245
      %1247 = vmatmul.bf16.gmra.mxu0 %v1194
      %v1248 = vpop.f32.mrf.mxu0
      %v1249 = vadd.f32 0.0, %v1248
      %v1250 = vpop.f32.mrf.mxu0
      %v1251 = vadd.f32 0.0, %v1250
      %1252 = vmatmul.bf16.gmra.mxu0 %v1196
      %v1253 = vpop.f32.mrf.mxu0
      %v1254 = vadd.f32 0.0, %v1253
      %v1255 = vpop.f32.mrf.mxu0
      %v1256 = vadd.f32 0.0, %v1255
      %1257 = vmatmul.bf16.gmra.mxu0 %v1198
      %v1258 = vpop.f32.mrf.mxu0
      %v1259 = vadd.f32 0.0, %v1258
      %v1260 = vpop.f32.mrf.mxu0
      %v1261 = vadd.f32 0.0, %v1260
      %1262 = vmatmul.bf16.gmra.mxu0 %v1200
      %v1263 = vpop.f32.mrf.mxu0
      %v1264 = vadd.f32 0.0, %v1263
      %v1265 = vpop.f32.mrf.mxu0
      %v1266 = vadd.f32 0.0, %v1265
      %1267 = vmatmul.bf16.gmra.mxu0 %v1202
      %v1268 = vpop.f32.mrf.mxu0
      %v1269 = vadd.f32 0.0, %v1268
      %v1270 = vpop.f32.mrf.mxu0
      %v1271 = vadd.f32 0.0, %v1270
      %1272 = vmatmul.bf16.gmra.mxu0 %v1204
      %v1273 = vpop.f32.mrf.mxu0
      %v1274 = vadd.f32 0.0, %v1273
      %v1275 = vpop.f32.mrf.mxu0
      %v1276 = vadd.f32 0.0, %v1275
      %1277 = vmatmul.bf16.gmra.mxu0 %v1206
      %v1278 = vpop.f32.mrf.mxu0
      %v1279 = vadd.f32 0.0, %v1278
      %v1280 = vpop.f32.mrf.mxu0
      %v1281 = vadd.f32 0.0, %v1280
      %1282 = vmatmul.bf16.gmra.mxu0 %v1208
      %v1283 = vpop.f32.mrf.mxu0
      %v1284 = vadd.f32 0.0, %v1283
      %v1285 = vpop.f32.mrf.mxu0
      %v1286 = vadd.f32 0.0, %v1285
      %1287 = vmatmul.bf16.gmra.mxu0 %v1210
      %v1288 = vpop.f32.mrf.mxu0
      %v1289 = vadd.f32 0.0, %v1288
      %v1290 = vpop.f32.mrf.mxu0
      %v1291 = vadd.f32 0.0, %v1290
      %1292 = vmatmul.bf16.gmra.mxu0 %v1212
      %v1293 = vpop.f32.mrf.mxu0
      %v1294 = vadd.f32 0.0, %v1293
      %v1295 = vpop.f32.mrf.mxu0
      %v1296 = vadd.f32 0.0, %v1295
      %1297 = vmatmul.bf16.gmra.mxu0 %v1214
      %v1298 = vpop.f32.mrf.mxu0
      %v1299 = vadd.f32 0.0, %v1298
      %v1300 = vpop.f32.mrf.mxu0
      %v1301 = vadd.f32 0.0, %v1300
      %1302 = vmatmul.bf16.gmra.mxu0 %v1216
      %v1303 = vpop.f32.mrf.mxu0
      %v1304 = vadd.f32 0.0, %v1303
      %v1305 = vpop.f32.mrf.mxu0
      %v1306 = vadd.f32 0.0, %v1305
      %1307 = vmatmul.bf16.gmra.mxu0 %v1218
      %v1308 = vpop.f32.mrf.mxu0
      %v1309 = vadd.f32 0.0, %v1308
      %v1310 = vpop.f32.mrf.mxu0
      %v1311 = vadd.f32 0.0, %v1310
      %1312 = vdwg.mxu0
      %v1313 = vsel %vm1134, %v1234, 0.0
      %v1314 = vsel %vm1134, %v1236, 0.0
      %v1315 = vadd.f32 %v1313, %v1314
      %v1316 = vsel %vm1134, %v1239, 0.0
      %v1317 = vadd.f32 %v1315, %v1316
      %v1318 = vsel %vm1134, %v1241, 0.0
      %v1319 = vadd.f32 %v1317, %v1318
      %v1320 = vsel %vm1134, %v1244, 0.0
      %v1321 = vadd.f32 %v1319, %v1320
      %v1322 = vsel %vm1134, %v1246, 0.0
      %v1323 = vadd.f32 %v1321, %v1322
      %v1324 = vsel %vm1134, %v1249, 0.0
      %v1325 = vadd.f32 %v1323, %v1324
      %v1326 = vsel %vm1134, %v1251, 0.0
      %v1327 = vadd.f32 %v1325, %v1326
      %v1328 = vsel %vm1134, %v1254, 0.0
      %v1329 = vadd.f32 %v1327, %v1328
      %v1330 = vsel %vm1134, %v1256, 0.0
      %v1331 = vadd.f32 %v1329, %v1330
      %v1332 = vsel %vm1134, %v1259, 0.0
      %v1333 = vadd.f32 %v1331, %v1332
      %v1334 = vsel %vm1134, %v1261, 0.0
      %v1335 = vadd.f32 %v1333, %v1334
      %v1336 = vsel %vm1134, %v1264, 0.0
      %v1337 = vadd.f32 %v1335, %v1336
      %v1338 = vsel %vm1134, %v1266, 0.0
      %v1339 = vadd.f32 %v1337, %v1338
      %v1340 = vsel %vm1134, %v1269, 0.0
      %v1341 = vadd.f32 %v1339, %v1340
      %v1342 = vsel %vm1134, %v1271, 0.0
      %v1343 = vadd.f32 %v1341, %v1342
      %v1344 = vsel %vm1134, %v1274, 0.0
      %v1345 = vadd.f32 %v1343, %v1344
      %v1346 = vsel %vm1134, %v1276, 0.0
      %v1347 = vadd.f32 %v1345, %v1346
      %v1348 = vsel %vm1134, %v1279, 0.0
      %v1349 = vadd.f32 %v1347, %v1348
      %v1350 = vsel %vm1134, %v1281, 0.0
      %v1351 = vadd.f32 %v1349, %v1350
      %v1352 = vsel %vm1134, %v1284, 0.0
      %v1353 = vadd.f32 %v1351, %v1352
      %v1354 = vsel %vm1134, %v1286, 0.0
      %v1355 = vadd.f32 %v1353, %v1354
      %v1356 = vsel %vm1134, %v1289, 0.0
      %v1357 = vadd.f32 %v1355, %v1356
      %v1358 = vsel %vm1134, %v1291, 0.0
      %v1359 = vadd.f32 %v1357, %v1358
      %v1360 = vsel %vm1134, %v1294, 0.0
      %v1361 = vadd.f32 %v1359, %v1360
      %v1362 = vsel %vm1134, %v1296, 0.0
      %v1363 = vadd.f32 %v1361, %v1362
      %v1364 = vsel %vm1134, %v1299, 0.0
      %v1365 = vadd.f32 %v1363, %v1364
      %v1366 = vsel %vm1134, %v1301, 0.0
      %v1367 = vadd.f32 %v1365, %v1366
      %v1368 = vsel %vm1134, %v1304, 0.0
      %v1369 = vadd.f32 %v1367, %v1368
      %v1370 = vsel %vm1134, %v1306, 0.0
      %v1371 = vadd.f32 %v1369, %v1370
      %v1372 = vsel %vm1134, %v1309, 0.0
      %v1373 = vadd.f32 %v1371, %v1372
      %v1374 = vsel %vm1134, %v1311, 0.0
      %v1375 = vadd.f32 %v1373, %v1374
      %v1376 = vrot.slane %v1375, 4
      %v1377 = vadd.f32 %v1375, %v1376
      %v1378 = vrot.slane %v1377, 2
      %v1379 = vadd.f32 %v1377, %v1378
      %v1380 = vrot.slane %v1379, 1
      %v1381 = vadd.f32 %v1379, %v1380
      %v1382 = vmul.f32 %v1234, %v1234
      %v1383 = vmul.f32 %v1236, %v1236
      %v1384 = vmul.f32 %v1239, %v1239
      %v1385 = vmul.f32 %v1241, %v1241
      %v1386 = vmul.f32 %v1244, %v1244
      %v1387 = vmul.f32 %v1246, %v1246
      %v1388 = vmul.f32 %v1249, %v1249
      %v1389 = vmul.f32 %v1251, %v1251
      %v1390 = vmul.f32 %v1254, %v1254
      %v1391 = vmul.f32 %v1256, %v1256
      %v1392 = vmul.f32 %v1259, %v1259
      %v1393 = vmul.f32 %v1261, %v1261
      %v1394 = vmul.f32 %v1264, %v1264
      %v1395 = vmul.f32 %v1266, %v1266
      %v1396 = vmul.f32 %v1269, %v1269
      %v1397 = vmul.f32 %v1271, %v1271
      %v1398 = vmul.f32 %v1274, %v1274
      %v1399 = vmul.f32 %v1276, %v1276
      %v1400 = vmul.f32 %v1279, %v1279
      %v1401 = vmul.f32 %v1281, %v1281
      %v1402 = vmul.f32 %v1284, %v1284
      %v1403 = vmul.f32 %v1286, %v1286
      %v1404 = vmul.f32 %v1289, %v1289
      %v1405 = vmul.f32 %v1291, %v1291
      %v1406 = vmul.f32 %v1294, %v1294
      %v1407 = vmul.f32 %v1296, %v1296
      %v1408 = vmul.f32 %v1299, %v1299
      %v1409 = vmul.f32 %v1301, %v1301
      %v1410 = vmul.f32 %v1304, %v1304
      %v1411 = vmul.f32 %v1306, %v1306
      %v1412 = vmul.f32 %v1309, %v1309
      %v1413 = vmul.f32 %v1311, %v1311
      %v1414 = vsel %vm1134, %v1382, 0.0
      %v1415 = vsel %vm1134, %v1383, 0.0
      %v1416 = vadd.f32 %v1414, %v1415
      %v1417 = vsel %vm1134, %v1384, 0.0
      %v1418 = vadd.f32 %v1416, %v1417
      %v1419 = vsel %vm1134, %v1385, 0.0
      %v1420 = vadd.f32 %v1418, %v1419
      %v1421 = vsel %vm1134, %v1386, 0.0
      %v1422 = vadd.f32 %v1420, %v1421
      %v1423 = vsel %vm1134, %v1387, 0.0
      %v1424 = vadd.f32 %v1422, %v1423
      %v1425 = vsel %vm1134, %v1388, 0.0
      %v1426 = vadd.f32 %v1424, %v1425
      %v1427 = vsel %vm1134, %v1389, 0.0
      %v1428 = vadd.f32 %v1426, %v1427
      %v1429 = vsel %vm1134, %v1390, 0.0
      %v1430 = vadd.f32 %v1428, %v1429
      %v1431 = vsel %vm1134, %v1391, 0.0
      %v1432 = vadd.f32 %v1430, %v1431
      %v1433 = vsel %vm1134, %v1392, 0.0
      %v1434 = vadd.f32 %v1432, %v1433
      %v1435 = vsel %vm1134, %v1393, 0.0
      %v1436 = vadd.f32 %v1434, %v1435
      %v1437 = vsel %vm1134, %v1394, 0.0
      %v1438 = vadd.f32 %v1436, %v1437
      %v1439 = vsel %vm1134, %v1395, 0.0
      %v1440 = vadd.f32 %v1438, %v1439
      %v1441 = vsel %vm1134, %v1396, 0.0
      %v1442 = vadd.f32 %v1440, %v1441
      %v1443 = vsel %vm1134, %v1397, 0.0
      %v1444 = vadd.f32 %v1442, %v1443
      %v1445 = vsel %vm1134, %v1398, 0.0
      %v1446 = vadd.f32 %v1444, %v1445
      %v1447 = vsel %vm1134, %v1399, 0.0
      %v1448 = vadd.f32 %v1446, %v1447
      %v1449 = vsel %vm1134, %v1400, 0.0
      %v1450 = vadd.f32 %v1448, %v1449
      %v1451 = vsel %vm1134, %v1401, 0.0
      %v1452 = vadd.f32 %v1450, %v1451
      %v1453 = vsel %vm1134, %v1402, 0.0
      %v1454 = vadd.f32 %v1452, %v1453
      %v1455 = vsel %vm1134, %v1403, 0.0
      %v1456 = vadd.f32 %v1454, %v1455
      %v1457 = vsel %vm1134, %v1404, 0.0
      %v1458 = vadd.f32 %v1456, %v1457
      %v1459 = vsel %vm1134, %v1405, 0.0
      %v1460 = vadd.f32 %v1458, %v1459
      %v1461 = vsel %vm1134, %v1406, 0.0
      %v1462 = vadd.f32 %v1460, %v1461
      %v1463 = vsel %vm1134, %v1407, 0.0
      %v1464 = vadd.f32 %v1462, %v1463
      %v1465 = vsel %vm1134, %v1408, 0.0
      %v1466 = vadd.f32 %v1464, %v1465
      %v1467 = vsel %vm1134, %v1409, 0.0
      %v1468 = vadd.f32 %v1466, %v1467
      %v1469 = vsel %vm1134, %v1410, 0.0
      %v1470 = vadd.f32 %v1468, %v1469
      %v1471 = vsel %vm1134, %v1411, 0.0
      %v1472 = vadd.f32 %v1470, %v1471
      %v1473 = vsel %vm1134, %v1412, 0.0
      %v1474 = vadd.f32 %v1472, %v1473
      %v1475 = vsel %vm1134, %v1413, 0.0
      %v1476 = vadd.f32 %v1474, %v1475
      %v1477 = vrot.slane %v1476, 4
      %v1478 = vadd.f32 %v1476, %v1477
      %v1479 = vrot.slane %v1478, 2
      %v1480 = vadd.f32 %v1478, %v1479
      %v1481 = vrot.slane %v1480, 1
      %v1482 = vadd.f32 %v1480, %v1481
      %vm1483 = vcmask 1040384
      %v1484 = vsel %vm1483, %v1381, %v1482
      %vm1485 = vcmask 254976
      %1486 = vst.msk [vmem:[%s175] sm:$0x3] %vm1485, %v1484
      %p1487 = scmp.lt.s32.totalorder %s17, 1
      %s1488 = scalar_select %p1487, %s17, 1
      %p1489 = scmp.lt.s32.totalorder %s18, 0
      %s1490 = scalar_select %p1489, %s18, 0
      %s1491 = sadd.s32 %s1490, %s1488
      %s1492 = smul.addr %s1491, 2
      %s1493 = scalar_lea.vmem %s2, %s1492
      // Predicated region
      $region29: #{upsampling_forward.2} parent=27 // pred_check
        %p1494 = pneg %p94
      $region30: #{upsampling_forward.2} parent=27 // pred_check_branch
        %1496 = sbr.rel (%p1494) target = $region32
      $region31: #{upsampling_forward.2} parent=27 // pred_region
        _
      $region32: #{upsampling_forward.2} parent=27 // pred_fallthru
        _
    $region28: #{upsampling_forward.2} parent=5 // pred_fallthru
      _
    %p1497 = scmp.le.s32.totalorder 2, %s8
    // Predicated region
    $region33: #{upsampling_forward.2} parent=5 // pred_check
      %p1498 = pneg %p1497
    $region34: #{upsampling_forward.2} parent=5 // pred_check_branch
      %1500 = sbr.rel (%p1498) target = $region36
    $region35: #{upsampling_forward.2} parent=5 // pred_region
      %s1501 = ssub.s32 %s8, 2
      // Predicated region
      $region37: #{upsampling_forward.2} parent=35 // pred_check
        %p1502 = pneg %p100
      $region38: #{upsampling_forward.2} parent=35 // pred_check_branch
        %1504 = sbr.rel (%p1502) target = $region40
      $region39: #{upsampling_forward.2} parent=35 // pred_region
        %p1505 = scmp.lt.s32.totalorder %s19, 1
        %s1506 = scalar_select %p1505, %s19, 1
        %p1507 = scmp.lt.s32.totalorder %s20, 0
        %s1508 = scalar_select %p1507, %s20, 0
        %s1509 = sadd.s32 %s1508, %s1506
        %s1510 = smul.addr %s1509, 2
        %s1511 = scalar_lea.vmem %s2, %s1510
      $region40: #{upsampling_forward.2} parent=35 // pred_fallthru
        _
    $region36: #{upsampling_forward.2} parent=5 // pred_fallthru
      _
  $region6: #{upsampling_forward.2} parent=0 // loop_footer
    %s12 = sadd.s32 1, %s8
  $region7: #{upsampling_forward.2} parent=0 // loop_footer_branch
    %7 = sbr.rel target = $region3
  $region8: #{upsampling_forward.2} parent=0 // loop_exit
    _

// kernel: upsampling_forward.3
$region0: #{upsampling_forward.3}
  #allocation0 [shape = 'u32[]', space=smem, size = 0x4, offset = 0x4, fixed_abs, tag = 'smem constant byte address 0x4 - core index']
  #allocation1 [shape = 'u32[72,128]{1,0:T(1,128)}', space=vmem, size = 0x9000, scoped, tag = 'internal scratch']
  %s0 = inlined_call_operand.vmem [shape: bf16[2,1,18,18,4], index: 0, kind: input, shape index: {}]
  %s1 = inlined_call_operand.vmem [shape: bf16[36,32], index: 1, kind: input, shape index: {}]
  %s2 = inlined_call_operand.vmem [shape: f32[2,32], index: 2, kind: input, shape index: {}]
  %s3 = inlined_call_operand.vmem [shape: f32[2,1,256,32], index: 3, kind: output, shape index: {}]
  %s4 = sld [smem:[#allocation0]]
  $region45: #{upsampling_forward.3} parent=0
    _
  %s6 = ssub.s32 1, %s4
  %s7 = scalar_select 0, %s6, %s4
  loop: start=0, step=1, limit=4
  $region2: #{upsampling_forward.3} parent=0 // loop_pre_header
    _
  $region3: #{upsampling_forward.3} parent=0 // loop_header
    %s9 = sphi 0, %s13
    %p10 = scmp.ge.s32.totalorder %s9, 4
    %s16 = sphi 0, %s28
    %s17 = sphi 0, %s24
    %s18 = sphi 0, %s16
    %s19 = sphi 0, %s17
    %s20 = sphi 0, %s18
    %s21 = sphi 0, %s19
    %s33 = sphi 0, %s35
    %s36 = sphi 0, %s33
    %s37 = sphi 0, %s36
    %s53 = sphi 0, %s37
    %s57 = sphi 0, %s57
    %s59 = sphi 0, %s57
    %s60 = sphi 0, %s59
    %s74 = sphi 0, %s60
    %s78 = sphi 0, %s78
    %s80 = sphi 0, %s78
    %s81 = sphi 0, %s80
    %s95 = sphi 0, %s81
    %s103 = sphi 0, %s105
    %s106 = sphi 0, %s103
    %s107 = sphi 0, %s106
    %s123 = sphi 0, %s107
  $region4: #{upsampling_forward.3} parent=0 // loop_header_branch
    %12 = sbr.rel (%p10) target = $region8
  $region5: #{upsampling_forward.3} parent=0 // loop_body
    %s14 = ssub.s32 %s9, 1
    %s15 = ssub.s32 %s9, 2
    %s22 = sadd.s32 1, %s17
    %p23 = scmp.ge.s32.totalorder %s22, 1
    %s24 = scalar_select %p23, 0, %s22
    %s25 = sadd.s32 1, %s16
    %s26 = scalar_select %p23, %s25, %s16
    %p27 = scmp.ge.s32.totalorder %s26, 2
    %s28 = scalar_select %p27, 0, %s26
    %s29 = ssub.s32 %s16, %s28
    %s30 = ssub.s32 %s17, %s24
    %s31 = sor.u32 %s29, %s30
    %p32 = scmp.eq.s32.totalorder %s31, 0
    %s34 = sadd.s32 %s33, 1
    %s35 = scalar_select %p32, %s33, %s34
    %p38 = pneg %p32
    %p39 = scmp.eq.s32.totalorder %s9, 1
    %p40 = por %p38, %p39
    %p41 = scmp.ne.s32.totalorder %s33, %s36
    %p42 = scmp.eq.s32.totalorder %s9, 0
    %p43 = por %p41, %p42
    %p44 = scmp.ne.s32.totalorder %s33, %s36
    %p45 = scmp.eq.s32.totalorder %s14, 1
    %p46 = por %p44, %p45
    %p47 = scmp.ne.s32.totalorder %s36, %s37
    %p48 = scmp.eq.s32.totalorder %s14, 0
    %p49 = por %p47, %p48
    %p50 = scmp.ne.s32.totalorder %s36, %s37
    %p51 = scmp.eq.s32.totalorder %s15, 1
    %p52 = por %p50, %p51
    %p54 = scmp.ne.s32.totalorder %s37, %s53
    %p55 = scmp.eq.s32.totalorder %s15, 0
    %p56 = por %p54, %p55
    %s58 = sadd.s32 %s57, 1
    %p61 = scmp.eq.s32.totalorder %s9, 1
    %p62 = scmp.ne.s32.totalorder %s57, %s59
    %p63 = scmp.eq.s32.totalorder %s9, 0
    %p64 = por %p62, %p63
    %p65 = scmp.ne.s32.totalorder %s57, %s59
    %p66 = scmp.eq.s32.totalorder %s14, 1
    %p67 = por %p65, %p66
    %p68 = scmp.ne.s32.totalorder %s59, %s60
    %p69 = scmp.eq.s32.totalorder %s14, 0
    %p70 = por %p68, %p69
    %p71 = scmp.ne.s32.totalorder %s59, %s60
    %p72 = scmp.eq.s32.totalorder %s15, 1
    %p73 = por %p71, %p72
    %p75 = scmp.ne.s32.totalorder %s60, %s74
    %p76 = scmp.eq.s32.totalorder %s15, 0
    %p77 = por %p75, %p76
    %s79 = sadd.s32 %s78, 1
    %p82 = scmp.eq.s32.totalorder %s9, 1
    %p83 = scmp.ne.s32.totalorder %s78, %s80
    %p84 = scmp.eq.s32.totalorder %s9, 0
    %p85 = por %p83, %p84
    %p86 = scmp.ne.s32.totalorder %s78, %s80
    %p87 = scmp.eq.s32.totalorder %s14, 1
    %p88 = por %p86, %p87
    %p89 = scmp.ne.s32.totalorder %s80, %s81
    %p90 = scmp.eq.s32.totalorder %s14, 0
    %p91 = por %p89, %p90
    %p92 = scmp.ne.s32.totalorder %s80, %s81
    %p93 = scmp.eq.s32.totalorder %s15, 1
    %p94 = por %p92, %p93
    %p96 = scmp.ne.s32.totalorder %s81, %s95
    %p97 = scmp.eq.s32.totalorder %s15, 0
    %p98 = por %p96, %p97
    %s99 = ssub.s32 %s16, %s28
    %s100 = ssub.s32 %s17, %s24
    %s101 = sor.u32 %s99, %s100
    %p102 = scmp.eq.s32.totalorder %s101, 0
    %s104 = sadd.s32 %s103, 1
    %s105 = scalar_select %p102, %s103, %s104
    %p108 = pneg %p102
    %p109 = scmp.eq.s32.totalorder %s9, 1
    %p110 = por %p108, %p109
    %p111 = scmp.ne.s32.totalorder %s103, %s106
    %p112 = scmp.eq.s32.totalorder %s9, 0
    %p113 = por %p111, %p112
    %p114 = scmp.ne.s32.totalorder %s103, %s106
    %p115 = scmp.eq.s32.totalorder %s14, 1
    %p116 = por %p114, %p115
    %p117 = scmp.ne.s32.totalorder %s106, %s107
    %p118 = scmp.eq.s32.totalorder %s14, 0
    %p119 = por %p117, %p118
    %p120 = scmp.ne.s32.totalorder %s106, %s107
    %p121 = scmp.eq.s32.totalorder %s15, 1
    %p122 = por %p120, %p121
    %p124 = scmp.ne.s32.totalorder %s107, %s123
    %p125 = scmp.eq.s32.totalorder %s15, 0
    %p126 = por %p124, %p125
    %p127 = scmp.le.s32.totalorder 1, %s9
    %p128 = scmp.lt.s32.totalorder %s9, 3
    %p129 = pnand %p127, %p128
    %p130 = pneg %p129
    // Predicated region
    $region9: #{upsampling_forward.3} parent=5 // pred_check
      _
    $region10: #{upsampling_forward.3} parent=5 // pred_check_branch
      %132 = sbr.rel (%p129) target = $region12
    $region11: #{upsampling_forward.3} parent=5 // pred_region
      %s133 = ssub.s32 %s9, 1
      // Predicated region
      $region13: #{upsampling_forward.3} parent=11 // pred_check
        %p134 = pneg %p70
      $region14: #{upsampling_forward.3} parent=11 // pred_check_branch
        %136 = sbr.rel (%p134) target = $region16
      $region15: #{upsampling_forward.3} parent=11 // pred_region
        _
      $region16: #{upsampling_forward.3} parent=11 // pred_fallthru
        _
      // Predicated region
      $region17: #{upsampling_forward.3} parent=11 // pred_check
        %p137 = pneg %p91
      $region18: #{upsampling_forward.3} parent=11 // pred_check_branch
        %139 = sbr.rel (%p137) target = $region20
      $region19: #{upsampling_forward.3} parent=11 // pred_region
        _
      $region20: #{upsampling_forward.3} parent=11 // pred_fallthru
        _
    $region12: #{upsampling_forward.3} parent=5 // pred_fallthru
      _
    %p140 = scmp.lt.s32.totalorder %s9, 2
    // Predicated region
    $region21: #{upsampling_forward.3} parent=5 // pred_check
      %p141 = pneg %p140
    $region22: #{upsampling_forward.3} parent=5 // pred_check_branch
      %143 = sbr.rel (%p141) target = $region24
    $region23: #{upsampling_forward.3} parent=5 // pred_region
      // Predicated region
      $region25: #{upsampling_forward.3} parent=23 // pred_check
        %p144 = pneg %p43
      $region26: #{upsampling_forward.3} parent=23 // pred_check_branch
        %146 = sbr.rel (%p144) target = $region28
      $region27: #{upsampling_forward.3} parent=23 // pred_region
        %p147 = scmp.lt.s32.totalorder %s16, 1
        %s148 = scalar_select %p147, %s16, 1
        %p149 = scmp.lt.s32.totalorder %s17, 0
        %s150 = scalar_select %p149, %s17, 0
        %s151 = smul.addr %s150, 54
        %s152 = smul.addr %s148, 54
        %s153 = sadd.s32 %s151, %s152
        %s154 = smul.addr %s153, 4
        %s155 = scalar_lea.vmem %s0, %s154
      $region28: #{upsampling_forward.3} parent=23 // pred_fallthru
        _
    $region24: #{upsampling_forward.3} parent=5 // pred_fallthru
      _
    %p156 = scmp.le.s32.totalorder 1, %s9
    %p157 = scmp.lt.s32.totalorder %s9, 3
    %p158 = pnand %p156, %p157
    %p159 = pneg %p158
    // Predicated region
    $region29: #{upsampling_forward.3} parent=5 // pred_check
      _
    $region30: #{upsampling_forward.3} parent=5 // pred_check_branch
      %161 = sbr.rel (%p158) target = $region32
    $region31: #{upsampling_forward.3} parent=5 // pred_region
      %s162 = ssub.s32 %s9, 1
      %p163 = scmp.lt.s32.totalorder %s18, 1
      %s164 = scalar_select %p163, %s18, 1
      %p165 = scmp.lt.s32.totalorder %s19, 0
      %s166 = scalar_select %p165, %s19, 0
      %s167 = smul.addr %s166, 54
      %s168 = smul.addr %s164, 54
      %s169 = sadd.s32 %s167, %s168
      %s170 = smul.addr %s169, 4
      %s171 = scalar_lea.vmem %s0, %s170
      %p172 = pneg %p49
      %p173 = pneg %p46
      %p174 = pneg %p70
      %p175 = pneg %p67
      %p176 = pneg %p91
      %p177 = pneg %p88
      %p178 = pneg %p119
      %p179 = pneg %p116
      %p180 = scmp.lt.s32.totalorder %s18, 1
      %s181 = scalar_select %p180, %s18, 1
      %p182 = scmp.lt.s32.totalorder %s19, 0
      %s183 = scalar_select %p182, %s19, 0
      %s184 = smul.addr %s183, 32
      %s185 = smul.addr %s181, 32
      %s186 = sadd.s32 %s184, %s185
      %s187 = smul.addr %s186, 8
      %s188 = scalar_lea.vmem %s3, %s187
      %p189 = scmp.lt.s32.totalorder %s18, 1
      %s190 = scalar_select %p189, %s18, 1
      %p191 = scmp.lt.s32.totalorder %s19, 0
      %s192 = scalar_select %p191, %s19, 0
      %s193 = smul.addr %s192, 54
      %s194 = smul.addr %s190, 54
      %s195 = sadd.s32 %s193, %s194
      %s196 = smul.addr %s195, 4
      %s197 = scalar_lea.vmem %s0, %s196
      %p198 = scmp.lt.s32.totalorder %s18, 1
      %s199 = scalar_select %p198, %s18, 1
      %p200 = scmp.lt.s32.totalorder %s19, 0
      %s201 = scalar_select %p200, %s19, 0
      %s202 = smul.addr %s201, 32
      %s203 = smul.addr %s199, 32
      %s204 = sadd.s32 %s202, %s203
      %s205 = smul.addr %s204, 8
      %s206 = scalar_lea.vmem %s3, %s205
      %v208 = vld [vmem:[%s197] sm:$0xf]
      %v209 = vld [vmem:[%s197 + $0x4] sm:$0xf]
      %v210 = vld [vmem:[%s197 + $0x8] sm:$0x1]
      %v211 = vld [vmem:[%s197 + $0xc] sm:$0xf]
      %v212 = vld [vmem:[%s197 + $0x10] sm:$0xf]
      %v213 = vld [vmem:[%s197 + $0x14] sm:$0x1]
      %v214 = vld [vmem:[%s197 + $0x18] sm:$0xf]
      %v215 = vld [vmem:[%s197 + $0x1c] sm:$0xf]
      %v216 = vld [vmem:[%s197 + $0x20] sm:$0x1]
      %v217 = vld [vmem:[%s197 + $0x24] sm:$0xf]
      %v218 = vld [vmem:[%s197 + $0x28] sm:$0xf]
      %v219 = vld [vmem:[%s197 + $0x2c] sm:$0x1]
      %v220 = vld [vmem:[%s197 + $0x30] sm:$0xf]
      %v221 = vld [vmem:[%s197 + $0x34] sm:$0xf]
      %v222 = vld [vmem:[%s197 + $0x38] sm:$0x1]
      %v223 = vld [vmem:[%s197 + $0x3c] sm:$0xf]
      %v224 = vld [vmem:[%s197 + $0x40] sm:$0xf]
      %v225 = vld [vmem:[%s197 + $0x44] sm:$0x1]
      %v226 = vld [vmem:[%s197 + $0x48] sm:$0xf]
      %v227 = vld [vmem:[%s197 + $0x4c] sm:$0xf]
      %v228 = vld [vmem:[%s197 + $0x50] sm:$0x1]
      %v229 = vld [vmem:[%s197 + $0x54] sm:$0xf]
      %v230 = vld [vmem:[%s197 + $0x58] sm:$0xf]
      %v231 = vld [vmem:[%s197 + $0x5c] sm:$0x1]
      %v232 = vld [vmem:[%s197 + $0x60] sm:$0xf]
      %v233 = vld [vmem:[%s197 + $0x64] sm:$0xf]
      %v234 = vld [vmem:[%s197 + $0x68] sm:$0x1]
      %v235 = vld [vmem:[%s197 + $0x6c] sm:$0xf]
      %v236 = vld [vmem:[%s197 + $0x70] sm:$0xf]
      %v237 = vld [vmem:[%s197 + $0x74] sm:$0x1]
      %v238 = vld [vmem:[%s197 + $0x78] sm:$0xf]
      %v239 = vld [vmem:[%s197 + $0x7c] sm:$0xf]
      %v240 = vld [vmem:[%s197 + $0x80] sm:$0x1]
      %v241 = vld [vmem:[%s197 + $0x84] sm:$0xf]
      %v242 = vld [vmem:[%s197 + $0x88] sm:$0xf]
      %v243 = vld [vmem:[%s197 + $0x8c] sm:$0x1]
      %v244 = vld [vmem:[%s197 + $0x90] sm:$0xf]
      %v245 = vld [vmem:[%s197 + $0x94] sm:$0xf]
      %v246 = vld [vmem:[%s197 + $0x98] sm:$0x1]
      %v247 = vld [vmem:[%s197 + $0x9c] sm:$0xf]
      %v248 = vld [vmem:[%s197 + $0xa0] sm:$0xf]
      %v249 = vld [vmem:[%s197 + $0xa4] sm:$0x1]
      %v250 = vld [vmem:[%s197 + $0xa8] sm:$0xf]
      %v251 = vld [vmem:[%s197 + $0xac] sm:$0xf]
      %v252 = vld [vmem:[%s197 + $0xb0] sm:$0x1]
      %v253 = vld [vmem:[%s197 + $0xb4] sm:$0xf]
      %v254 = vld [vmem:[%s197 + $0xb8] sm:$0xf]
      %v255 = vld [vmem:[%s197 + $0xbc] sm:$0x1]
      %v256 = vld [vmem:[%s197 + $0xc0] sm:$0xf]
      %v257 = vld [vmem:[%s197 + $0xc4] sm:$0xf]
      %v258 = vld [vmem:[%s197 + $0xc8] sm:$0x1]
      %v259 = vld [vmem:[%s197 + $0xcc] sm:$0xf]
      %v260 = vld [vmem:[%s197 + $0xd0] sm:$0xf]
      %v261 = vld [vmem:[%s197 + $0xd4] sm:$0x1]
      %v294 = vunpack.c.l.b16 %v208
      %v295 = vunpack.c.l.b16 %v209
      %v296 = vunpack.c.l.b16 %v211
      %v297 = vunpack.c.l.b16 %v212
      %v298 = vunpack.c.l.b16 %v214
      %v299 = vunpack.c.l.b16 %v215
      %v300 = vunpack.c.l.b16 %v217
      %v301 = vunpack.c.l.b16 %v218
      %v302 = vunpack.c.l.b16 %v220
      %v303 = vunpack.c.l.b16 %v221
      %v304 = vunpack.c.l.b16 %v223
      %v305 = vunpack.c.l.b16 %v224
      %v306 = vunpack.c.l.b16 %v226
      %v307 = vunpack.c.l.b16 %v227
      %v308 = vunpack.c.l.b16 %v229
      %v309 = vunpack.c.l.b16 %v230
      %v310 = vunpack.c.l.b16 %v232
      %v311 = vunpack.c.l.b16 %v233
      %v312 = vunpack.c.l.b16 %v235
      %v313 = vunpack.c.l.b16 %v236
      %v314 = vunpack.c.l.b16 %v238
      %v315 = vunpack.c.l.b16 %v239
      %v316 = vunpack.c.l.b16 %v241
      %v317 = vunpack.c.l.b16 %v242
      %v318 = vunpack.c.l.b16 %v244
      %v319 = vunpack.c.l.b16 %v245
      %v320 = vunpack.c.l.b16 %v247
      %v321 = vunpack.c.l.b16 %v248
      %v322 = vunpack.c.l.b16 %v250
      %v323 = vunpack.c.l.b16 %v251
      %v324 = vunpack.c.l.b16 %v253
      %v325 = vunpack.c.l.b16 %v254
      %v326 = vpack.c.b16 %v295, %v294
      %v327 = vpack.c.b16 %v297, %v296
      %v328 = vpack.c.b16 %v299, %v298
      %v329 = vpack.c.b16 %v301, %v300
      %v330 = vpack.c.b16 %v303, %v302
      %v331 = vpack.c.b16 %v305, %v304
      %v332 = vpack.c.b16 %v307, %v306
      %v333 = vpack.c.b16 %v309, %v308
      %v334 = vpack.c.b16 %v311, %v310
      %v335 = vpack.c.b16 %v313, %v312
      %v336 = vpack.c.b16 %v315, %v314
      %v337 = vpack.c.b16 %v317, %v316
      %v338 = vpack.c.b16 %v319, %v318
      %v339 = vpack.c.b16 %v321, %v320
      %v340 = vpack.c.b16 %v323, %v322
      %v341 = vpack.c.b16 %v325, %v324
      %v358 = vunpack.c.l.b16 %v210
      %v359 = vunpack.c.l.b16 %v213
      %v360 = vunpack.c.l.b16 %v216
      %v361 = vunpack.c.l.b16 %v219
      %v362 = vunpack.c.l.b16 %v222
      %v363 = vunpack.c.l.b16 %v225
      %v364 = vunpack.c.l.b16 %v228
      %v365 = vunpack.c.l.b16 %v231
      %v366 = vunpack.c.l.b16 %v234
      %v367 = vunpack.c.l.b16 %v237
      %v368 = vunpack.c.l.b16 %v240
      %v369 = vunpack.c.l.b16 %v243
      %v370 = vunpack.c.l.b16 %v246
      %v371 = vunpack.c.l.b16 %v249
      %v372 = vunpack.c.l.b16 %v252
      %v373 = vunpack.c.l.b16 %v255
      %v374 = vpack.c.b16 %v358, %v358
      %v375 = vpack.c.b16 %v359, %v359
      %v376 = vpack.c.b16 %v360, %v360
      %v377 = vpack.c.b16 %v361, %v361
      %v378 = vpack.c.b16 %v362, %v362
      %v379 = vpack.c.b16 %v363, %v363
      %v380 = vpack.c.b16 %v364, %v364
      %v381 = vpack.c.b16 %v365, %v365
      %v382 = vpack.c.b16 %v366, %v366
      %v383 = vpack.c.b16 %v367, %v367
      %v384 = vpack.c.b16 %v368, %v368
      %v385 = vpack.c.b16 %v369, %v369
      %v386 = vpack.c.b16 %v370, %v370
      %v387 = vpack.c.b16 %v371, %v371
      %v388 = vpack.c.b16 %v372, %v372
      %v389 = vpack.c.b16 %v373, %v373
      %vm390 = vsmask.f32 7424
      %v392 = vshrl.u32 %v326, 16
      %v394 = vshll.u32 %v326, 16
      %v396 = vrot.slane %v394, 1
      %v397 = vor.u32 %v392, %v396
      %v399 = vshll.u32 %v374, 16
      %v401 = vrot.slane %v399, 1
      %v402 = vsel %vm390, %v397, %v401
      %v404 = vshrl.u32 %v327, 16
      %v406 = vshll.u32 %v327, 16
      %v408 = vrot.slane %v406, 1
      %v409 = vor.u32 %v404, %v408
      %v411 = vshll.u32 %v375, 16
      %v413 = vrot.slane %v411, 1
      %v414 = vsel %vm390, %v409, %v413
      %v416 = vshrl.u32 %v328, 16
      %v418 = vshll.u32 %v328, 16
      %v420 = vrot.slane %v418, 1
      %v421 = vor.u32 %v416, %v420
      %v423 = vshll.u32 %v376, 16
      %v425 = vrot.slane %v423, 1
      %v426 = vsel %vm390, %v421, %v425
      %v428 = vshrl.u32 %v329, 16
      %v430 = vshll.u32 %v329, 16
      %v432 = vrot.slane %v430, 1
      %v433 = vor.u32 %v428, %v432
      %v435 = vshll.u32 %v377, 16
      %v437 = vrot.slane %v435, 1
      %v438 = vsel %vm390, %v433, %v437
      %v440 = vshrl.u32 %v330, 16
      %v442 = vshll.u32 %v330, 16
      %v444 = vrot.slane %v442, 1
      %v445 = vor.u32 %v440, %v444
      %v447 = vshll.u32 %v378, 16
      %v449 = vrot.slane %v447, 1
      %v450 = vsel %vm390, %v445, %v449
      %v452 = vshrl.u32 %v331, 16
      %v454 = vshll.u32 %v331, 16
      %v456 = vrot.slane %v454, 1
      %v457 = vor.u32 %v452, %v456
      %v459 = vshll.u32 %v379, 16
      %v461 = vrot.slane %v459, 1
      %v462 = vsel %vm390, %v457, %v461
      %v464 = vshrl.u32 %v332, 16
      %v466 = vshll.u32 %v332, 16
      %v468 = vrot.slane %v466, 1
      %v469 = vor.u32 %v464, %v468
      %v471 = vshll.u32 %v380, 16
      %v473 = vrot.slane %v471, 1
      %v474 = vsel %vm390, %v469, %v473
      %v476 = vshrl.u32 %v333, 16
      %v478 = vshll.u32 %v333, 16
      %v480 = vrot.slane %v478, 1
      %v481 = vor.u32 %v476, %v480
      %v483 = vshll.u32 %v381, 16
      %v485 = vrot.slane %v483, 1
      %v486 = vsel %vm390, %v481, %v485
      %v488 = vshrl.u32 %v334, 16
      %v490 = vshll.u32 %v334, 16
      %v492 = vrot.slane %v490, 1
      %v493 = vor.u32 %v488, %v492
      %v495 = vshll.u32 %v382, 16
      %v497 = vrot.slane %v495, 1
      %v498 = vsel %vm390, %v493, %v497
      %v500 = vshrl.u32 %v335, 16
      %v502 = vshll.u32 %v335, 16
      %v504 = vrot.slane %v502, 1
      %v505 = vor.u32 %v500, %v504
      %v507 = vshll.u32 %v383, 16
      %v509 = vrot.slane %v507, 1
      %v510 = vsel %vm390, %v505, %v509
      %v512 = vshrl.u32 %v336, 16
      %v514 = vshll.u32 %v336, 16
      %v516 = vrot.slane %v514, 1
      %v517 = vor.u32 %v512, %v516
      %v519 = vshll.u32 %v384, 16
      %v521 = vrot.slane %v519, 1
      %v522 = vsel %vm390, %v517, %v521
      %v524 = vshrl.u32 %v337, 16
      %v526 = vshll.u32 %v337, 16
      %v528 = vrot.slane %v526, 1
      %v529 = vor.u32 %v524, %v528
      %v531 = vshll.u32 %v385, 16
      %v533 = vrot.slane %v531, 1
      %v534 = vsel %vm390, %v529, %v533
      %v536 = vshrl.u32 %v338, 16
      %v538 = vshll.u32 %v338, 16
      %v540 = vrot.slane %v538, 1
      %v541 = vor.u32 %v536, %v540
      %v543 = vshll.u32 %v386, 16
      %v545 = vrot.slane %v543, 1
      %v546 = vsel %vm390, %v541, %v545
      %v548 = vshrl.u32 %v339, 16
      %v550 = vshll.u32 %v339, 16
      %v552 = vrot.slane %v550, 1
      %v553 = vor.u32 %v548, %v552
      %v555 = vshll.u32 %v387, 16
      %v557 = vrot.slane %v555, 1
      %v558 = vsel %vm390, %v553, %v557
      %v560 = vshrl.u32 %v340, 16
      %v562 = vshll.u32 %v340, 16
      %v564 = vrot.slane %v562, 1
      %v565 = vor.u32 %v560, %v564
      %v567 = vshll.u32 %v388, 16
      %v569 = vrot.slane %v567, 1
      %v570 = vsel %vm390, %v565, %v569
      %v572 = vshrl.u32 %v341, 16
      %v574 = vshll.u32 %v341, 16
      %v576 = vrot.slane %v574, 1
      %v577 = vor.u32 %v572, %v576
      %v579 = vshll.u32 %v389, 16
      %v581 = vrot.slane %v579, 1
      %v582 = vsel %vm390, %v577, %v581
      %583 = vrot.lane.b32.xlu0 %v402, 4
      %v584 = vpop.permute.xlu0 %583
      %585 = vrot.lane.b32.xlu0 %v414, 4
      %v586 = vpop.permute.xlu0 %585
      %587 = vrot.lane.b32.xlu0 %v426, 4
      %v588 = vpop.permute.xlu0 %587
      %589 = vrot.lane.b32.xlu0 %v438, 4
      %v590 = vpop.permute.xlu0 %589
      %591 = vrot.lane.b32.xlu0 %v450, 4
      %v592 = vpop.permute.xlu0 %591
      %593 = vrot.lane.b32.xlu0 %v462, 4
      %v594 = vpop.permute.xlu0 %593
      %595 = vrot.lane.b32.xlu0 %v474, 4
      %v596 = vpop.permute.xlu0 %595
      %597 = vrot.lane.b32.xlu0 %v486, 4
      %v598 = vpop.permute.xlu0 %597
      %599 = vrot.lane.b32.xlu0 %v498, 4
      %v600 = vpop.permute.xlu0 %599
      %601 = vrot.lane.b32.xlu0 %v510, 4
      %v602 = vpop.permute.xlu0 %601
      %603 = vrot.lane.b32.xlu0 %v522, 4
      %v604 = vpop.permute.xlu0 %603
      %605 = vrot.lane.b32.xlu0 %v534, 4
      %v606 = vpop.permute.xlu0 %605
      %607 = vrot.lane.b32.xlu0 %v546, 4
      %v608 = vpop.permute.xlu0 %607
      %609 = vrot.lane.b32.xlu0 %v558, 4
      %v610 = vpop.permute.xlu0 %609
      %611 = vrot.lane.b32.xlu0 %v570, 4
      %v612 = vpop.permute.xlu0 %611
      %613 = vrot.lane.b32.xlu0 %v582, 4
      %v614 = vpop.permute.xlu0 %613
      %vm615 = vcmask 1046528
      %v616 = vrot.slane %v326, 1
      %v617 = vrot.slane %v374, 1
      %v618 = vsel %vm615, %v616, %v617
      %v619 = vrot.slane %v327, 1
      %v620 = vrot.slane %v375, 1
      %v621 = vsel %vm615, %v619, %v620
      %v622 = vrot.slane %v328, 1
      %v623 = vrot.slane %v376, 1
      %v624 = vsel %vm615, %v622, %v623
      %v625 = vrot.slane %v329, 1
      %v626 = vrot.slane %v377, 1
      %v627 = vsel %vm615, %v625, %v626
      %v628 = vrot.slane %v330, 1
      %v629 = vrot.slane %v378, 1
      %v630 = vsel %vm615, %v628, %v629
      %v631 = vrot.slane %v331, 1
      %v632 = vrot.slane %v379, 1
      %v633 = vsel %vm615, %v631, %v632
      %v634 = vrot.slane %v332, 1
      %v635 = vrot.slane %v380, 1
      %v636 = vsel %vm615, %v634, %v635
      %v637 = vrot.slane %v333, 1
      %v638 = vrot.slane %v381, 1
      %v639 = vsel %vm615, %v637, %v638
      %v640 = vrot.slane %v334, 1
      %v641 = vrot.slane %v382, 1
      %v642 = vsel %vm615, %v640, %v641
      %v643 = vrot.slane %v335, 1
      %v644 = vrot.slane %v383, 1
      %v645 = vsel %vm615, %v643, %v644
      %v646 = vrot.slane %v336, 1
      %v647 = vrot.slane %v384, 1
      %v648 = vsel %vm615, %v646, %v647
      %v649 = vrot.slane %v337, 1
      %v650 = vrot.slane %v385, 1
      %v651 = vsel %vm615, %v649, %v650
      %v652 = vrot.slane %v338, 1
      %v653 = vrot.slane %v386, 1
      %v654 = vsel %vm615, %v652, %v653
      %v655 = vrot.slane %v339, 1
      %v656 = vrot.slane %v387, 1
      %v657 = vsel %vm615, %v655, %v656
      %v658 = vrot.slane %v340, 1
      %v659 = vrot.slane %v388, 1
      %v660 = vsel %vm615, %v658, %v659
      %v661 = vrot.slane %v341, 1
      %v662 = vrot.slane %v389, 1
      %v663 = vsel %vm615, %v661, %v662
      %664 = vrot.lane.b32.xlu0 %v618, 8
      %v665 = vpop.permute.xlu0 %664
      %666 = vrot.lane.b32.xlu0 %v621, 8
      %v667 = vpop.permute.xlu0 %666
      %668 = vrot.lane.b32.xlu0 %v624, 8
      %v669 = vpop.permute.xlu0 %668
      %670 = vrot.lane.b32.xlu0 %v627, 8
      %v671 = vpop.permute.xlu0 %670
      %672 = vrot.lane.b32.xlu0 %v630, 8
      %v673 = vpop.permute.xlu0 %672
      %674 = vrot.lane.b32.xlu0 %v633, 8
      %v675 = vpop.permute.xlu0 %674
      %676 = vrot.lane.b32.xlu0 %v636, 8
      %v677 = vpop.permute.xlu0 %676
      %678 = vrot.lane.b32.xlu0 %v639, 8
      %v679 = vpop.permute.xlu0 %678
      %680 = vrot.lane.b32.xlu0 %v642, 8
      %v681 = vpop.permute.xlu0 %680
      %682 = vrot.lane.b32.xlu0 %v645, 8
      %v683 = vpop.permute.xlu0 %682
      %684 = vrot.lane.b32.xlu0 %v648, 8
      %v685 = vpop.permute.xlu0 %684
      %686 = vrot.lane.b32.xlu0 %v651, 8
      %v687 = vpop.permute.xlu0 %686
      %688 = vrot.lane.b32.xlu0 %v654, 8
      %v689 = vpop.permute.xlu0 %688
      %690 = vrot.lane.b32.xlu0 %v657, 8
      %v691 = vpop.permute.xlu0 %690
      %692 = vrot.lane.b32.xlu0 %v660, 8
      %v693 = vpop.permute.xlu0 %692
      %694 = vrot.lane.b32.xlu0 %v663, 8
      %v695 = vpop.permute.xlu0 %694
      %v698 = vunpack.c.l.b16 %v256
      %v699 = vunpack.c.l.b16 %v257
      %v700 = vpack.c.b16 %v699, %v698
      %701 = vrot.lane.b32.xlu0 %v327, 12
      %v702 = vpop.permute.xlu0 %701
      %703 = vrot.lane.b32.xlu0 %v328, 12
      %v704 = vpop.permute.xlu0 %703
      %705 = vrot.lane.b32.xlu0 %v329, 12
      %v706 = vpop.permute.xlu0 %705
      %707 = vrot.lane.b32.xlu0 %v330, 12
      %v708 = vpop.permute.xlu0 %707
      %709 = vrot.lane.b32.xlu0 %v331, 12
      %v710 = vpop.permute.xlu0 %709
      %711 = vrot.lane.b32.xlu0 %v332, 12
      %v712 = vpop.permute.xlu0 %711
      %713 = vrot.lane.b32.xlu0 %v333, 12
      %v714 = vpop.permute.xlu0 %713
      %715 = vrot.lane.b32.xlu0 %v334, 12
      %v716 = vpop.permute.xlu0 %715
      %717 = vrot.lane.b32.xlu0 %v335, 12
      %v718 = vpop.permute.xlu0 %717
      %719 = vrot.lane.b32.xlu0 %v336, 12
      %v720 = vpop.permute.xlu0 %719
      %721 = vrot.lane.b32.xlu0 %v337, 12
      %v722 = vpop.permute.xlu0 %721
      %723 = vrot.lane.b32.xlu0 %v338, 12
      %v724 = vpop.permute.xlu0 %723
      %725 = vrot.lane.b32.xlu0 %v339, 12
      %v726 = vpop.permute.xlu0 %725
      %727 = vrot.lane.b32.xlu0 %v340, 12
      %v728 = vpop.permute.xlu0 %727
      %729 = vrot.lane.b32.xlu0 %v341, 12
      %v730 = vpop.permute.xlu0 %729
      %731 = vrot.lane.b32.xlu0 %v700, 12
      %v732 = vpop.permute.xlu0 %731
      %v734 = vunpack.c.l.b16 %v258
      %v735 = vpack.c.b16 %v734, %v734
      %v737 = vshrl.u32 %v700, 16
      %v739 = vshll.u32 %v700, 16
      %v741 = vrot.slane %v739, 1
      %v742 = vor.u32 %v737, %v741
      %v744 = vshll.u32 %v735, 16
      %v746 = vrot.slane %v744, 1
      %v747 = vsel %vm390, %v742, %v746
      %748 = vrot.lane.b32.xlu0 %v414, 16
      %v749 = vpop.permute.xlu0 %748
      %750 = vrot.lane.b32.xlu0 %v426, 16
      %v751 = vpop.permute.xlu0 %750
      %752 = vrot.lane.b32.xlu0 %v438, 16
      %v753 = vpop.permute.xlu0 %752
      %754 = vrot.lane.b32.xlu0 %v450, 16
      %v755 = vpop.permute.xlu0 %754
      %756 = vrot.lane.b32.xlu0 %v462, 16
      %v757 = vpop.permute.xlu0 %756
      %758 = vrot.lane.b32.xlu0 %v474, 16
      %v759 = vpop.permute.xlu0 %758
      %760 = vrot.lane.b32.xlu0 %v486, 16
      %v761 = vpop.permute.xlu0 %760
      %762 = vrot.lane.b32.xlu0 %v498, 16
      %v763 = vpop.permute.xlu0 %762
      %764 = vrot.lane.b32.xlu0 %v510, 16
      %v765 = vpop.permute.xlu0 %764
      %766 = vrot.lane.b32.xlu0 %v522, 16
      %v767 = vpop.permute.xlu0 %766
      %768 = vrot.lane.b32.xlu0 %v534, 16
      %v769 = vpop.permute.xlu0 %768
      %770 = vrot.lane.b32.xlu0 %v546, 16
      %v771 = vpop.permute.xlu0 %770
      %772 = vrot.lane.b32.xlu0 %v558, 16
      %v773 = vpop.permute.xlu0 %772
      %774 = vrot.lane.b32.xlu0 %v570, 16
      %v775 = vpop.permute.xlu0 %774
      %776 = vrot.lane.b32.xlu0 %v582, 16
      %v777 = vpop.permute.xlu0 %776
      %778 = vrot.lane.b32.xlu0 %v747, 16
      %v779 = vpop.permute.xlu0 %778
      %v780 = vrot.slane %v700, 1
      %v781 = vrot.slane %v735, 1
      %v782 = vsel %vm615, %v780, %v781
      %783 = vrot.lane.b32.xlu0 %v621, 20
      %v784 = vpop.permute.xlu0 %783
      %785 = vrot.lane.b32.xlu0 %v624, 20
      %v786 = vpop.permute.xlu0 %785
      %787 = vrot.lane.b32.xlu0 %v627, 20
      %v788 = vpop.permute.xlu0 %787
      %789 = vrot.lane.b32.xlu0 %v630, 20
      %v790 = vpop.permute.xlu0 %789
      %791 = vrot.lane.b32.xlu0 %v633, 20
      %v792 = vpop.permute.xlu0 %791
      %793 = vrot.lane.b32.xlu0 %v636, 20
      %v794 = vpop.permute.xlu0 %793
      %795 = vrot.lane.b32.xlu0 %v639, 20
      %v796 = vpop.permute.xlu0 %795
      %797 = vrot.lane.b32.xlu0 %v642, 20
      %v798 = vpop.permute.xlu0 %797
      %799 = vrot.lane.b32.xlu0 %v645, 20
      %v800 = vpop.permute.xlu0 %799
      %801 = vrot.lane.b32.xlu0 %v648, 20
      %v802 = vpop.permute.xlu0 %801
      %803 = vrot.lane.b32.xlu0 %v651, 20
      %v804 = vpop.permute.xlu0 %803
      %805 = vrot.lane.b32.xlu0 %v654, 20
      %v806 = vpop.permute.xlu0 %805
      %807 = vrot.lane.b32.xlu0 %v657, 20
      %v808 = vpop.permute.xlu0 %807
      %809 = vrot.lane.b32.xlu0 %v660, 20
      %v810 = vpop.permute.xlu0 %809
      %811 = vrot.lane.b32.xlu0 %v663, 20
      %v812 = vpop.permute.xlu0 %811
      %813 = vrot.lane.b32.xlu0 %v782, 20
      %v814 = vpop.permute.xlu0 %813
      %v817 = vunpack.c.l.b16 %v259
      %v818 = vunpack.c.l.b16 %v260
      %v819 = vpack.c.b16 %v818, %v817
      %820 = vrot.lane.b32.xlu0 %v328, 24
      %v821 = vpop.permute.xlu0 %820
      %822 = vrot.lane.b32.xlu0 %v329, 24
      %v823 = vpop.permute.xlu0 %822
      %824 = vrot.lane.b32.xlu0 %v330, 24
      %v825 = vpop.permute.xlu0 %824
      %826 = vrot.lane.b32.xlu0 %v331, 24
      %v827 = vpop.permute.xlu0 %826
      %828 = vrot.lane.b32.xlu0 %v332, 24
      %v829 = vpop.permute.xlu0 %828
      %830 = vrot.lane.b32.xlu0 %v333, 24
      %v831 = vpop.permute.xlu0 %830
      %832 = vrot.lane.b32.xlu0 %v334, 24
      %v833 = vpop.permute.xlu0 %832
      %834 = vrot.lane.b32.xlu0 %v335, 24
      %v835 = vpop.permute.xlu0 %834
      %836 = vrot.lane.b32.xlu0 %v336, 24
      %v837 = vpop.permute.xlu0 %836
      %838 = vrot.lane.b32.xlu0 %v337, 24
      %v839 = vpop.permute.xlu0 %838
      %840 = vrot.lane.b32.xlu0 %v338, 24
      %v841 = vpop.permute.xlu0 %840
      %842 = vrot.lane.b32.xlu0 %v339, 24
      %v843 = vpop.permute.xlu0 %842
      %844 = vrot.lane.b32.xlu0 %v340, 24
      %v845 = vpop.permute.xlu0 %844
      %846 = vrot.lane.b32.xlu0 %v341, 24
      %v847 = vpop.permute.xlu0 %846
      %848 = vrot.lane.b32.xlu0 %v700, 24
      %v849 = vpop.permute.xlu0 %848
      %850 = vrot.lane.b32.xlu0 %v819, 24
      %v851 = vpop.permute.xlu0 %850
      %v853 = vunpack.c.l.b16 %v261
      %v854 = vpack.c.b16 %v853, %v853
      %v856 = vshrl.u32 %v819, 16
      %v858 = vshll.u32 %v819, 16
      %v860 = vrot.slane %v858, 1
      %v861 = vor.u32 %v856, %v860
      %v863 = vshll.u32 %v854, 16
      %v865 = vrot.slane %v863, 1
      %v866 = vsel %vm390, %v861, %v865
      %867 = vrot.lane.b32.xlu0 %v426, 28
      %v868 = vpop.permute.xlu0 %867
      %869 = vrot.lane.b32.xlu0 %v438, 28
      %v870 = vpop.permute.xlu0 %869
      %871 = vrot.lane.b32.xlu0 %v450, 28
      %v872 = vpop.permute.xlu0 %871
      %873 = vrot.lane.b32.xlu0 %v462, 28
      %v874 = vpop.permute.xlu0 %873
      %875 = vrot.lane.b32.xlu0 %v474, 28
      %v876 = vpop.permute.xlu0 %875
      %877 = vrot.lane.b32.xlu0 %v486, 28
      %v878 = vpop.permute.xlu0 %877
      %879 = vrot.lane.b32.xlu0 %v498, 28
      %v880 = vpop.permute.xlu0 %879
      %881 = vrot.lane.b32.xlu0 %v510, 28
      %v882 = vpop.permute.xlu0 %881
      %883 = vrot.lane.b32.xlu0 %v522, 28
      %v884 = vpop.permute.xlu0 %883
      %885 = vrot.lane.b32.xlu0 %v534, 28
      %v886 = vpop.permute.xlu0 %885
      %887 = vrot.lane.b32.xlu0 %v546, 28
      %v888 = vpop.permute.xlu0 %887
      %889 = vrot.lane.b32.xlu0 %v558, 28
      %v890 = vpop.permute.xlu0 %889
      %891 = vrot.lane.b32.xlu0 %v570, 28
      %v892 = vpop.permute.xlu0 %891
      %893 = vrot.lane.b32.xlu0 %v582, 28
      %v894 = vpop.permute.xlu0 %893
      %895 = vrot.lane.b32.xlu0 %v747, 28
      %v896 = vpop.permute.xlu0 %895
      %897 = vrot.lane.b32.xlu0 %v866, 28
      %v898 = vpop.permute.xlu0 %897
      %v899 = vrot.slane %v819, 1
      %v900 = vrot.slane %v854, 1
      %v901 = vsel %vm615, %v899, %v900
      %902 = vrot.lane.b32.xlu0 %v624, 32
      %v903 = vpop.permute.xlu0 %902
      %904 = vrot.lane.b32.xlu0 %v627, 32
      %v905 = vpop.permute.xlu0 %904
      %906 = vrot.lane.b32.xlu0 %v630, 32
      %v907 = vpop.permute.xlu0 %906
      %908 = vrot.lane.b32.xlu0 %v633, 32
      %v909 = vpop.permute.xlu0 %908
      %910 = vrot.lane.b32.xlu0 %v636, 32
      %v911 = vpop.permute.xlu0 %910
      %912 = vrot.lane.b32.xlu0 %v639, 32
      %v913 = vpop.permute.xlu0 %912
      %914 = vrot.lane.b32.xlu0 %v642, 32
      %v915 = vpop.permute.xlu0 %914
      %916 = vrot.lane.b32.xlu0 %v645, 32
      %v917 = vpop.permute.xlu0 %916
      %918 = vrot.lane.b32.xlu0 %v648, 32
      %v919 = vpop.permute.xlu0 %918
      %920 = vrot.lane.b32.xlu0 %v651, 32
      %v921 = vpop.permute.xlu0 %920
      %922 = vrot.lane.b32.xlu0 %v654, 32
      %v923 = vpop.permute.xlu0 %922
      %924 = vrot.lane.b32.xlu0 %v657, 32
      %v925 = vpop.permute.xlu0 %924
      %926 = vrot.lane.b32.xlu0 %v660, 32
      %v927 = vpop.permute.xlu0 %926
      %928 = vrot.lane.b32.xlu0 %v663, 32
      %v929 = vpop.permute.xlu0 %928
      %930 = vrot.lane.b32.xlu0 %v782, 32
      %v931 = vpop.permute.xlu0 %930
      %932 = vrot.lane.b32.xlu0 %v901, 32
      %v933 = vpop.permute.xlu0 %932
      %vm934 = vcmask 31744
      %v936 = vsel %vm934, %v326, %v584
      %v938 = vsel %vm934, %v327, %v586
      %v940 = vsel %vm934, %v328, %v588
      %v942 = vsel %vm934, %v329, %v590
      %v944 = vsel %vm934, %v330, %v592
      %v946 = vsel %vm934, %v331, %v594
      %v948 = vsel %vm934, %v332, %v596
      %v950 = vsel %vm934, %v333, %v598
      %v952 = vsel %vm934, %v334, %v600
      %v954 = vsel %vm934, %v335, %v602
      %v956 = vsel %vm934, %v336, %v604
      %v958 = vsel %vm934, %v337, %v606
      %v960 = vsel %vm934, %v338, %v608
      %v962 = vsel %vm934, %v339, %v610
      %v964 = vsel %vm934, %v340, %v612
      %v966 = vsel %vm934, %v341, %v614
      %vm967 = vcmask 64512
      %v969 = vsel %vm967, %v936, %v665
      %v971 = vsel %vm967, %v938, %v667
      %v973 = vsel %vm967, %v940, %v669
      %v975 = vsel %vm967, %v942, %v671
      %v977 = vsel %vm967, %v944, %v673
      %v979 = vsel %vm967, %v946, %v675
      %v981 = vsel %vm967, %v948, %v677
      %v983 = vsel %vm967, %v950, %v679
      %v985 = vsel %vm967, %v952, %v681
      %v987 = vsel %vm967, %v954, %v683
      %v989 = vsel %vm967, %v956, %v685
      %v991 = vsel %vm967, %v958, %v687
      %v993 = vsel %vm967, %v960, %v689
      %v995 = vsel %vm967, %v962, %v691
      %v997 = vsel %vm967, %v964, %v693
      %v999 = vsel %vm967, %v966, %v695
      %vm1000 = vcmask 97280
      %v1002 = vsel %vm1000, %v969, %v702
      %v1004 = vsel %vm1000, %v971, %v704
      %v1006 = vsel %vm1000, %v973, %v706
      %v1008 = vsel %vm1000, %v975, %v708
      %v1010 = vsel %vm1000, %v977, %v710
      %v1012 = vsel %vm1000, %v979, %v712
      %v1014 = vsel %vm1000, %v981, %v714
      %v1016 = vsel %vm1000, %v983, %v716
      %v1018 = vsel %vm1000, %v985, %v718
      %v1020 = vsel %vm1000, %v987, %v720
      %v1022 = vsel %vm1000, %v989, %v722
      %v1024 = vsel %vm1000, %v991, %v724
      %v1026 = vsel %vm1000, %v993, %v726
      %v1028 = vsel %vm1000, %v995, %v728
      %v1030 = vsel %vm1000, %v997, %v730
      %v1032 = vsel %vm1000, %v999, %v732
      %vm1033 = vcmask 130048
      %v1035 = vsel %vm1033, %v1002, %v749
      %v1037 = vsel %vm1033, %v1004, %v751
      %v1039 = vsel %vm1033, %v1006, %v753
      %v1041 = vsel %vm1033, %v1008, %v755
      %v1043 = vsel %vm1033, %v1010, %v757
      %v1045 = vsel %vm1033, %v1012, %v759
      %v1047 = vsel %vm1033, %v1014, %v761
      %v1049 = vsel %vm1033, %v1016, %v763
      %v1051 = vsel %vm1033, %v1018, %v765
      %v1053 = vsel %vm1033, %v1020, %v767
      %v1055 = vsel %vm1033, %v1022, %v769
      %v1057 = vsel %vm1033, %v1024, %v771
      %v1059 = vsel %vm1033, %v1026, %v773
      %v1061 = vsel %vm1033, %v1028, %v775
      %v1063 = vsel %vm1033, %v1030, %v777
      %v1065 = vsel %vm1033, %v1032, %v779
      %vm1066 = vcmask 162816
      %v1068 = vsel %vm1066, %v1035, %v784
      %v1070 = vsel %vm1066, %v1037, %v786
      %v1072 = vsel %vm1066, %v1039, %v788
      %v1074 = vsel %vm1066, %v1041, %v790
      %v1076 = vsel %vm1066, %v1043, %v792
      %v1078 = vsel %vm1066, %v1045, %v794
      %v1080 = vsel %vm1066, %v1047, %v796
      %v1082 = vsel %vm1066, %v1049, %v798
      %v1084 = vsel %vm1066, %v1051, %v800
      %v1086 = vsel %vm1066, %v1053, %v802
      %v1088 = vsel %vm1066, %v1055, %v804
      %v1090 = vsel %vm1066, %v1057, %v806
      %v1092 = vsel %vm1066, %v1059, %v808
      %v1094 = vsel %vm1066, %v1061, %v810
      %v1096 = vsel %vm1066, %v1063, %v812
      %v1098 = vsel %vm1066, %v1065, %v814
      %vm1099 = vcmask 195584
      %v1101 = vsel %vm1099, %v1068, %v821
      %v1103 = vsel %vm1099, %v1070, %v823
      %v1105 = vsel %vm1099, %v1072, %v825
      %v1107 = vsel %vm1099, %v1074, %v827
      %v1109 = vsel %vm1099, %v1076, %v829
      %v1111 = vsel %vm1099, %v1078, %v831
      %v1113 = vsel %vm1099, %v1080, %v833
      %v1115 = vsel %vm1099, %v1082, %v835
      %v1117 = vsel %vm1099, %v1084, %v837
      %v1119 = vsel %vm1099, %v1086, %v839
      %v1121 = vsel %vm1099, %v1088, %v841
      %v1123 = vsel %vm1099, %v1090, %v843
      %v1125 = vsel %vm1099, %v1092, %v845
      %v1127 = vsel %vm1099, %v1094, %v847
      %v1129 = vsel %vm1099, %v1096, %v849
      %v1131 = vsel %vm1099, %v1098, %v851
      %vm1132 = vcmask 228352
      %v1134 = vsel %vm1132, %v1101, %v868
      %v1136 = vsel %vm1132, %v1103, %v870
      %v1138 = vsel %vm1132, %v1105, %v872
      %v1140 = vsel %vm1132, %v1107, %v874
      %v1142 = vsel %vm1132, %v1109, %v876
      %v1144 = vsel %vm1132, %v1111, %v878
      %v1146 = vsel %vm1132, %v1113, %v880
      %v1148 = vsel %vm1132, %v1115, %v882
      %v1150 = vsel %vm1132, %v1117, %v884
      %v1152 = vsel %vm1132, %v1119, %v886
      %v1154 = vsel %vm1132, %v1121, %v888
      %v1156 = vsel %vm1132, %v1123, %v890
      %v1158 = vsel %vm1132, %v1125, %v892
      %v1160 = vsel %vm1132, %v1127, %v894
      %v1162 = vsel %vm1132, %v1129, %v896
      %v1164 = vsel %vm1132, %v1131, %v898
      %vm1165 = vcmask 261120
      %v1167 = vsel %vm1165, %v1134, %v903
      %v1169 = vsel %vm1165, %v1136, %v905
      %v1171 = vsel %vm1165, %v1138, %v907
      %v1173 = vsel %vm1165, %v1140, %v909
      %v1175 = vsel %vm1165, %v1142, %v911
      %v1177 = vsel %vm1165, %v1144, %v913
      %v1179 = vsel %vm1165, %v1146, %v915
      %v1181 = vsel %vm1165, %v1148, %v917
      %v1183 = vsel %vm1165, %v1150, %v919
      %v1185 = vsel %vm1165, %v1152, %v921
      %v1187 = vsel %vm1165, %v1154, %v923
      %v1189 = vsel %vm1165, %v1156, %v925
      %v1191 = vsel %vm1165, %v1158, %v927
      %v1193 = vsel %vm1165, %v1160, %v929
      %v1195 = vsel %vm1165, %v1162, %v931
      %v1197 = vsel %vm1165, %v1164, %v933
      %v1198 = vld [vmem:[%s1] sm:$0xf]
      %v1199 = vld [vmem:[%s1 + $0x4] sm:$0xf]
      %v1200 = vld [vmem:[%s1 + $0x8] sm:$0xf]
      %v1201 = vld [vmem:[%s1 + $0xc] sm:$0xf]
      %v1202 = vld [vmem:[%s1 + $0x10] sm:$0x3]
      %v1208 = vunpack.c.l.b16 %v1198
      %v1209 = vunpack.c.l.b16 %v1199
      %v1210 = vunpack.c.l.b16 %v1200
      %v1211 = vunpack.c.l.b16 %v1201
      %v1212 = vunpack.c.l.b16 %v1202
      %v1213 = vpack.c.b16 %v1209, %v1208
      %v1214 = vpack.c.b16 %v1211, %v1210
      %v1215 = vpack.c.b16 %v1212, %v1212
      %vm1218 = vcmask 293888
      %v1219 = vsel %vm1218, %v1167, 0
      %v1221 = vsel %vm1218, %v1169, 0
      %v1223 = vsel %vm1218, %v1171, 0
      %v1225 = vsel %vm1218, %v1173, 0
      %v1227 = vsel %vm1218, %v1175, 0
      %v1229 = vsel %vm1218, %v1177, 0
      %v1231 = vsel %vm1218, %v1179, 0
      %v1233 = vsel %vm1218, %v1181, 0
      %v1235 = vsel %vm1218, %v1183, 0
      %v1237 = vsel %vm1218, %v1185, 0
      %v1239 = vsel %vm1218, %v1187, 0
      %v1241 = vsel %vm1218, %v1189, 0
      %v1243 = vsel %vm1218, %v1191, 0
      %v1245 = vsel %vm1218, %v1193, 0
      %v1247 = vsel %vm1218, %v1195, 0
      %v1249 = vsel %vm1218, %v1197, 0
      %vm1251 = vcmask 1041408
      %v1253 = vsel %vm1251, %v1215, 0
      %1255 = vmatpush.bf16.msra.mxu0 0
      %1256 = vmatpush.bf16.msra.mxu0 0
      %1257 = vmatpush.bf16.msra.mxu0 0
      %1258 = vmatpush.bf16.msra.mxu0 0
      %1259 = vmatpush.bf16.msra.mxu0 0
      %1260 = vmatpush.bf16.msra.mxu0 %v1253
      %1261 = vmatpush.bf16.msra.mxu0 %v1214
      %1262 = vmatpush.bf16.msra.mxu0 %v1213
      %1263 = vmatmul.bf16.gmra.mxu0 %v1219
      %v1264 = vpop.f32.mrf.mxu0
      %v1265 = vadd.f32 0.0, %v1264
      %v1266 = vpop.f32.mrf.mxu0
      %v1267 = vadd.f32 0.0, %v1266
      %1268 = vmatmul.bf16.gmra.mxu0 %v1221
      %v1269 = vpop.f32.mrf.mxu0
      %v1270 = vadd.f32 0.0, %v1269
      %v1271 = vpop.f32.mrf.mxu0
      %v1272 = vadd.f32 0.0, %v1271
      %1273 = vmatmul.bf16.gmra.mxu0 %v1223
      %v1274 = vpop.f32.mrf.mxu0
      %v1275 = vadd.f32 0.0, %v1274
      %v1276 = vpop.f32.mrf.mxu0
      %v1277 = vadd.f32 0.0, %v1276
      %1278 = vmatmul.bf16.gmra.mxu0 %v1225
      %v1279 = vpop.f32.mrf.mxu0
      %v1280 = vadd.f32 0.0, %v1279
      %v1281 = vpop.f32.mrf.mxu0
      %v1282 = vadd.f32 0.0, %v1281
      %1283 = vmatmul.bf16.gmra.mxu0 %v1227
      %v1284 = vpop.f32.mrf.mxu0
      %v1285 = vadd.f32 0.0, %v1284
      %v1286 = vpop.f32.mrf.mxu0
      %v1287 = vadd.f32 0.0, %v1286
      %1288 = vmatmul.bf16.gmra.mxu0 %v1229
      %v1289 = vpop.f32.mrf.mxu0
      %v1290 = vadd.f32 0.0, %v1289
      %v1291 = vpop.f32.mrf.mxu0
      %v1292 = vadd.f32 0.0, %v1291
      %1293 = vmatmul.bf16.gmra.mxu0 %v1231
      %v1294 = vpop.f32.mrf.mxu0
      %v1295 = vadd.f32 0.0, %v1294
      %v1296 = vpop.f32.mrf.mxu0
      %v1297 = vadd.f32 0.0, %v1296
      %1298 = vmatmul.bf16.gmra.mxu0 %v1233
      %v1299 = vpop.f32.mrf.mxu0
      %v1300 = vadd.f32 0.0, %v1299
      %v1301 = vpop.f32.mrf.mxu0
      %v1302 = vadd.f32 0.0, %v1301
      %1303 = vmatmul.bf16.gmra.mxu0 %v1235
      %v1304 = vpop.f32.mrf.mxu0
      %v1305 = vadd.f32 0.0, %v1304
      %v1306 = vpop.f32.mrf.mxu0
      %v1307 = vadd.f32 0.0, %v1306
      %1308 = vmatmul.bf16.gmra.mxu0 %v1237
      %v1309 = vpop.f32.mrf.mxu0
      %v1310 = vadd.f32 0.0, %v1309
      %v1311 = vpop.f32.mrf.mxu0
      %v1312 = vadd.f32 0.0, %v1311
      %1313 = vmatmul.bf16.gmra.mxu0 %v1239
      %v1314 = vpop.f32.mrf.mxu0
      %v1315 = vadd.f32 0.0, %v1314
      %v1316 = vpop.f32.mrf.mxu0
      %v1317 = vadd.f32 0.0, %v1316
      %1318 = vmatmul.bf16.gmra.mxu0 %v1241
      %v1319 = vpop.f32.mrf.mxu0
      %v1320 = vadd.f32 0.0, %v1319
      %v1321 = vpop.f32.mrf.mxu0
      %v1322 = vadd.f32 0.0, %v1321
      %1323 = vmatmul.bf16.gmra.mxu0 %v1243
      %v1324 = vpop.f32.mrf.mxu0
      %v1325 = vadd.f32 0.0, %v1324
      %v1326 = vpop.f32.mrf.mxu0
      %v1327 = vadd.f32 0.0, %v1326
      %1328 = vmatmul.bf16.gmra.mxu0 %v1245
      %v1329 = vpop.f32.mrf.mxu0
      %v1330 = vadd.f32 0.0, %v1329
      %v1331 = vpop.f32.mrf.mxu0
      %v1332 = vadd.f32 0.0, %v1331
      %1333 = vmatmul.bf16.gmra.mxu0 %v1247
      %v1334 = vpop.f32.mrf.mxu0
      %v1335 = vadd.f32 0.0, %v1334
      %v1336 = vpop.f32.mrf.mxu0
      %v1337 = vadd.f32 0.0, %v1336
      %1338 = vmatmul.bf16.gmra.mxu0 %v1249
      %v1339 = vpop.f32.mrf.mxu0
      %v1340 = vadd.f32 0.0, %v1339
      %v1341 = vpop.f32.mrf.mxu0
      %v1342 = vadd.f32 0.0, %v1341
      %1343 = vdwg.mxu0
      %v1344 = vld [vmem:[%s2] sm:$0x1]
      %v1345 = vperm.slane %v1344, 0
      %v1346 = vmul.f32 %v1265, %v1345
      %v1347 = vmul.f32 %v1267, %v1345
      %v1348 = vmul.f32 %v1270, %v1345
      %v1349 = vmul.f32 %v1272, %v1345
      %v1350 = vmul.f32 %v1275, %v1345
      %v1351 = vmul.f32 %v1277, %v1345
      %v1352 = vmul.f32 %v1280, %v1345
      %v1353 = vmul.f32 %v1282, %v1345
      %v1354 = vmul.f32 %v1285, %v1345
      %v1355 = vmul.f32 %v1287, %v1345
      %v1356 = vmul.f32 %v1290, %v1345
      %v1357 = vmul.f32 %v1292, %v1345
      %v1358 = vmul.f32 %v1295, %v1345
      %v1359 = vmul.f32 %v1297, %v1345
      %v1360 = vmul.f32 %v1300, %v1345
      %v1361 = vmul.f32 %v1302, %v1345
      %v1362 = vmul.f32 %v1305, %v1345
      %v1363 = vmul.f32 %v1307, %v1345
      %v1364 = vmul.f32 %v1310, %v1345
      %v1365 = vmul.f32 %v1312, %v1345
      %v1366 = vmul.f32 %v1315, %v1345
      %v1367 = vmul.f32 %v1317, %v1345
      %v1368 = vmul.f32 %v1320, %v1345
      %v1369 = vmul.f32 %v1322, %v1345
      %v1370 = vmul.f32 %v1325, %v1345
      %v1371 = vmul.f32 %v1327, %v1345
      %v1372 = vmul.f32 %v1330, %v1345
      %v1373 = vmul.f32 %v1332, %v1345
      %v1374 = vmul.f32 %v1335, %v1345
      %v1375 = vmul.f32 %v1337, %v1345
      %v1376 = vmul.f32 %v1340, %v1345
      %v1377 = vmul.f32 %v1342, %v1345
      %v1378 = vld [vmem:[%s2 + $0x1] sm:$0x1]
      %v1379 = vperm.slane %v1378, 0
      %v1380 = vadd.f32 %v1346, %v1379
      %v1381 = vadd.f32 %v1347, %v1379
      %v1382 = vadd.f32 %v1348, %v1379
      %v1383 = vadd.f32 %v1349, %v1379
      %v1384 = vadd.f32 %v1350, %v1379
      %v1385 = vadd.f32 %v1351, %v1379
      %v1386 = vadd.f32 %v1352, %v1379
      %v1387 = vadd.f32 %v1353, %v1379
      %v1388 = vadd.f32 %v1354, %v1379
      %v1389 = vadd.f32 %v1355, %v1379
      %v1390 = vadd.f32 %v1356, %v1379
      %v1391 = vadd.f32 %v1357, %v1379
      %v1392 = vadd.f32 %v1358, %v1379
      %v1393 = vadd.f32 %v1359, %v1379
      %v1394 = vadd.f32 %v1360, %v1379
      %v1395 = vadd.f32 %v1361, %v1379
      %v1396 = vadd.f32 %v1362, %v1379
      %v1397 = vadd.f32 %v1363, %v1379
      %v1398 = vadd.f32 %v1364, %v1379
      %v1399 = vadd.f32 %v1365, %v1379
      %v1400 = vadd.f32 %v1366, %v1379
      %v1401 = vadd.f32 %v1367, %v1379
      %v1402 = vadd.f32 %v1368, %v1379
      %v1403 = vadd.f32 %v1369, %v1379
      %v1404 = vadd.f32 %v1370, %v1379
      %v1405 = vadd.f32 %v1371, %v1379
      %v1406 = vadd.f32 %v1372, %v1379
      %v1407 = vadd.f32 %v1373, %v1379
      %v1408 = vadd.f32 %v1374, %v1379
      %v1409 = vadd.f32 %v1375, %v1379
      %v1410 = vadd.f32 %v1376, %v1379
      %v1411 = vadd.f32 %v1377, %v1379
      %v1412 = vmax.f32 %v1380, 0.0
      %v1413 = vmax.f32 %v1381, 0.0
      %v1414 = vmax.f32 %v1382, 0.0
      %v1415 = vmax.f32 %v1383, 0.0
      %v1416 = vmax.f32 %v1384, 0.0
      %v1417 = vmax.f32 %v1385, 0.0
      %v1418 = vmax.f32 %v1386, 0.0
      %v1419 = vmax.f32 %v1387, 0.0
      %v1420 = vmax.f32 %v1388, 0.0
      %v1421 = vmax.f32 %v1389, 0.0
      %v1422 = vmax.f32 %v1390, 0.0
      %v1423 = vmax.f32 %v1391, 0.0
      %v1424 = vmax.f32 %v1392, 0.0
      %v1425 = vmax.f32 %v1393, 0.0
      %v1426 = vmax.f32 %v1394, 0.0
      %v1427 = vmax.f32 %v1395, 0.0
      %v1428 = vmax.f32 %v1396, 0.0
      %v1429 = vmax.f32 %v1397, 0.0
      %v1430 = vmax.f32 %v1398, 0.0
      %v1431 = vmax.f32 %v1399, 0.0
      %v1432 = vmax.f32 %v1400, 0.0
      %v1433 = vmax.f32 %v1401, 0.0
      %v1434 = vmax.f32 %v1402, 0.0
      %v1435 = vmax.f32 %v1403, 0.0
      %v1436 = vmax.f32 %v1404, 0.0
      %v1437 = vmax.f32 %v1405, 0.0
      %v1438 = vmax.f32 %v1406, 0.0
      %v1439 = vmax.f32 %v1407, 0.0
      %v1440 = vmax.f32 %v1408, 0.0
      %v1441 = vmax.f32 %v1409, 0.0
      %v1442 = vmax.f32 %v1410, 0.0
      %v1443 = vmax.f32 %v1411, 0.0
      %1444 = vst.msk [vmem:[%s206] sm:$0xff] %vm1165, %v1412
      %1445 = vst.msk [vmem:[%s206 + $0x8] sm:$0xff] %vm1165, %v1413
      %1446 = vst.msk [vmem:[%s206 + $0x10] sm:$0xff] %vm1165, %v1414
      %1447 = vst.msk [vmem:[%s206 + $0x18] sm:$0xff] %vm1165, %v1415
      %1448 = vst.msk [vmem:[%s206 + $0x20] sm:$0xff] %vm1165, %v1416
      %1449 = vst.msk [vmem:[%s206 + $0x28] sm:$0xff] %vm1165, %v1417
      %1450 = vst.msk [vmem:[%s206 + $0x30] sm:$0xff] %vm1165, %v1418
      %1451 = vst.msk [vmem:[%s206 + $0x38] sm:$0xff] %vm1165, %v1419
      %1452 = vst.msk [vmem:[%s206 + $0x40] sm:$0xff] %vm1165, %v1420
      %1453 = vst.msk [vmem:[%s206 + $0x48] sm:$0xff] %vm1165, %v1421
      %1454 = vst.msk [vmem:[%s206 + $0x50] sm:$0xff] %vm1165, %v1422
      %1455 = vst.msk [vmem:[%s206 + $0x58] sm:$0xff] %vm1165, %v1423
      %1456 = vst.msk [vmem:[%s206 + $0x60] sm:$0xff] %vm1165, %v1424
      %1457 = vst.msk [vmem:[%s206 + $0x68] sm:$0xff] %vm1165, %v1425
      %1458 = vst.msk [vmem:[%s206 + $0x70] sm:$0xff] %vm1165, %v1426
      %1459 = vst.msk [vmem:[%s206 + $0x78] sm:$0xff] %vm1165, %v1427
      %1460 = vst.msk [vmem:[%s206 + $0x80] sm:$0xff] %vm1165, %v1428
      %1461 = vst.msk [vmem:[%s206 + $0x88] sm:$0xff] %vm1165, %v1429
      %1462 = vst.msk [vmem:[%s206 + $0x90] sm:$0xff] %vm1165, %v1430
      %1463 = vst.msk [vmem:[%s206 + $0x98] sm:$0xff] %vm1165, %v1431
      %1464 = vst.msk [vmem:[%s206 + $0xa0] sm:$0xff] %vm1165, %v1432
      %1465 = vst.msk [vmem:[%s206 + $0xa8] sm:$0xff] %vm1165, %v1433
      %1466 = vst.msk [vmem:[%s206 + $0xb0] sm:$0xff] %vm1165, %v1434
      %1467 = vst.msk [vmem:[%s206 + $0xb8] sm:$0xff] %vm1165, %v1435
      %1468 = vst.msk [vmem:[%s206 + $0xc0] sm:$0xff] %vm1165, %v1436
      %1469 = vst.msk [vmem:[%s206 + $0xc8] sm:$0xff] %vm1165, %v1437
      %1470 = vst.msk [vmem:[%s206 + $0xd0] sm:$0xff] %vm1165, %v1438
      %1471 = vst.msk [vmem:[%s206 + $0xd8] sm:$0xff] %vm1165, %v1439
      %1472 = vst.msk [vmem:[%s206 + $0xe0] sm:$0xff] %vm1165, %v1440
      %1473 = vst.msk [vmem:[%s206 + $0xe8] sm:$0xff] %vm1165, %v1441
      %1474 = vst.msk [vmem:[%s206 + $0xf0] sm:$0xff] %vm1165, %v1442
      %1475 = vst.msk [vmem:[%s206 + $0xf8] sm:$0xff] %vm1165, %v1443
      %p1476 = scmp.lt.s32.totalorder %s18, 1
      %s1477 = scalar_select %p1476, %s18, 1
      %p1478 = scmp.lt.s32.totalorder %s19, 0
      %s1479 = scalar_select %p1478, %s19, 0
      %s1480 = smul.addr %s1479, 32
      %s1481 = smul.addr %s1477, 32
      %s1482 = sadd.s32 %s1480, %s1481
      %s1483 = smul.addr %s1482, 8
      %s1484 = scalar_lea.vmem %s3, %s1483
      // Predicated region
      $region33: #{upsampling_forward.3} parent=31 // pred_check
        %p1485 = pneg %p116
      $region34: #{upsampling_forward.3} parent=31 // pred_check_branch
        %1487 = sbr.rel (%p1485) target = $region36
      $region35: #{upsampling_forward.3} parent=31 // pred_region
        _
      $region36: #{upsampling_forward.3} parent=31 // pred_fallthru
        _
    $region32: #{upsampling_forward.3} parent=5 // pred_fallthru
      _
    %p1488 = scmp.le.s32.totalorder 2, %s9
    // Predicated region
    $region37: #{upsampling_forward.3} parent=5 // pred_check
      %p1489 = pneg %p1488
    $region38: #{upsampling_forward.3} parent=5 // pred_check_branch
      %1491 = sbr.rel (%p1489) target = $region40
    $region39: #{upsampling_forward.3} parent=5 // pred_region
      %s1492 = ssub.s32 %s9, 2
      // Predicated region
      $region41: #{upsampling_forward.3} parent=39 // pred_check
        %p1493 = pneg %p122
      $region42: #{upsampling_forward.3} parent=39 // pred_check_branch
        %1495 = sbr.rel (%p1493) target = $region44
      $region43: #{upsampling_forward.3} parent=39 // pred_region
        %p1496 = scmp.lt.s32.totalorder %s20, 1
        %s1497 = scalar_select %p1496, %s20, 1
        %p1498 = scmp.lt.s32.totalorder %s21, 0
        %s1499 = scalar_select %p1498, %s21, 0
        %s1500 = smul.addr %s1499, 32
        %s1501 = smul.addr %s1497, 32
        %s1502 = sadd.s32 %s1500, %s1501
        %s1503 = smul.addr %s1502, 8
        %s1504 = scalar_lea.vmem %s3, %s1503
      $region44: #{upsampling_forward.3} parent=39 // pred_fallthru
        _
    $region40: #{upsampling_forward.3} parent=5 // pred_fallthru
      _
  $region6: #{upsampling_forward.3} parent=0 // loop_footer
    %s13 = sadd.s32 1, %s9
  $region7: #{upsampling_forward.3} parent=0 // loop_footer_branch
    %8 = sbr.rel target = $region3
  $region8: #{upsampling_forward.3} parent=0 // loop_exit
    _

</llo_original>
